<compile_context>
chip_gen: v6e
topology: v6e:2x2x1
jax: 0.10.0
libtpu: 0.0.40
codegen_flags: <defaults>
</compile_context>

<pallas_src>
import jax
import jax.numpy as jnp
from jax.experimental import pallas as pl
from jax.experimental.pallas import tpu as pltpu


def _round_up(x, m):
    return ((x + m - 1) // m) * m


def _fold_bn(gamma, beta, running_mean, running_var, eps_bn=1e-5):
    scale = gamma / jnp.sqrt(running_var + eps_bn)
    shift = beta - running_mean * scale
    return scale, shift


# ----------------------------- fused Pallas kernel ---------------------------

def fused_topology_kernel(eps_ref,              # SMEM  (L,)        f32   1+eps per layer
                          adj_ref,              # VMEM  (N_pad,N_pad) bf16 dense adjacency
                          x0_ref,               # VMEM  (N_pad,P)   bf16  padded input feats
                          pool_ref,             # VMEM  (G_pad,N_pad) bf16 0/1 one-hot
                          invcnt_ref,           # VMEM  (G_pad,1)   f32   1/|graph| (mean)
                          w1_ref, c1_ref,       # VMEM  (L,P,P) bf16 / (L,1,P) f32
                          w2_ref, c2_ref,       # VMEM  (L,P,P) bf16 / (L,1,P) f32
                          out_ref):             # VMEM  (G_pad,P)   f32
    """All GIN layers + graph mean-pooling, fully unrolled, one invocation."""
    num_layers = w1_ref.shape[0]
    h = x0_ref[...]                                           # bf16 (N_pad, P)

    for l in range(num_layers):                               # static unroll
        # GINConv neighbor aggregation (aggr='add'): A[dst, src] @ h  (bf16 MXU, f32 acc)
        agg = jnp.dot(adj_ref[...], h, preferred_element_type=jnp.float32)

        # (1 + eps) * x + agg   -- (1+eps) is an SMEM scalar -> single f32 FMA
        z = h.astype(jnp.float32) * eps_ref[l] + agg

        # Linear1 + BatchNorm1d(eval) + ReLU   (BN folded: W1' = W1*scale, c1 = b1*scale+shift)
        z = jnp.dot(z.astype(jnp.bfloat16), w1_ref[l],
                    preferred_element_type=jnp.float32) + c1_ref[l]
        z = jnp.maximum(z, 0.0)

        # Dropout -> identity in eval mode
        # Linear2 + BatchNorm1d(eval) + ReLU   (same folding)
        z = jnp.dot(z.astype(jnp.bfloat16), w2_ref[l],
                    preferred_element_type=jnp.float32) + c2_ref[l]
        z = jnp.maximum(z, 0.0)

        h = z.astype(jnp.bfloat16)                            # resident activation in bf16

    # scatter(x, batch, reduce='mean'):  bf16 0/1 one-hot matmul (f32 acc) then
    # exact f32 normalization by 1/count.  Padded-node columns of pool are zero,
    # so ReLU(c)>0 garbage in padded rows of h can never contaminate the output.
    pooled = jnp.dot(pool_ref[...], h, preferred_element_type=jnp.float32)
    out_ref[...] = pooled * invcnt_ref[...]


# ----------------------------- wrapper ---------------------------------------

def topology_channel_forward(x, edge_index, batch, layers, num_graphs,
                             agg_team="mean"):
    """gat=False path of TopologyChannel.forward (inference mode)."""
    n, d_in = x.shape
    hidden = layers[0]["w2"].shape[1]
    num_layers = len(layers)

    # lane-dense padding
    P = max(_round_up(d_in, 128), _round_up(hidden, 128))   # feature dim (lanes)
    n_pad = _round_up(n, 128)                               # node dim
    g_pad = _round_up(num_graphs, 8)                        # graph dim (sublanes)

    src, dst = edge_index[0], edge_index[1]
    # dense adjacency for flow='source_to_target': message x[src] -> node dst.
    # Edge multiplicities are small integers (< 256) -> exact in bf16.
    adj = jnp.zeros((n_pad, n_pad), jnp.float32).at[dst, src].add(1.0)
    adj = adj.astype(jnp.bfloat16)

    # 0/1 pooling one-hot (exact in bf16) + separate f32 mean normalization
    one_hot = jnp.zeros((g_pad, n_pad), jnp.float32).at[batch, jnp.arange(n)].set(1.0)
    counts = jnp.maximum(one_hot.sum(axis=1, keepdims=True), 1.0)     # (g_pad, 1)
    if agg_team == "mean":
        inv_counts = 1.0 / counts
    else:                                                             # 'add' / 'sum'
        inv_counts = jnp.ones_like(counts)
    pool_mat = one_hot.astype(jnp.bfloat16)

    x_p = jnp.zeros((n_pad, P), jnp.float32).at[:n, :d_in].set(x).astype(jnp.bfloat16)

    # fold BN into the Linears, zero-pad to (P, P), stack all layers
    w1s, c1s, w2s, c2s, eps_vals = [], [], [], [], []
    for i, p in enumerate(layers):
        din_i = d_in if i == 0 else hidden
        s1, t1 = _fold_bn(p["g1"], p["be1"], p["rm1"], p["rv1"])
        s2, t2 = _fold_bn(p["g2"], p["be2"], p["rm2"], p["rv2"])
        w1f = p["w1"] * s1[None, :]
        c1f = p["b1"] * s1 + t1
        w2f = p["w2"] * s2[None, :]
        c2f = p["b2"] * s2 + t2
        w1s.append(jnp.zeros((P, P), jnp.float32).at[:din_i, :hidden].set(w1f))
        w2s.append(jnp.zeros((P, P), jnp.float32).at[:hidden, :hidden].set(w2f))
        c1s.append(jnp.zeros((1, P), jnp.float32).at[0, :hidden].set(c1f))
        c2s.append(jnp.zeros((1, P), jnp.float32).at[0, :hidden].set(c2f))
        eps_vals.append(1.0 + p["eps"])
    w1s = jnp.stack(w1s).astype(jnp.bfloat16)      # (L, P, P)
    w2s = jnp.stack(w2s).astype(jnp.bfloat16)      # (L, P, P)
    c1s = jnp.stack(c1s)                           # (L, 1, P) f32
    c2s = jnp.stack(c2s)                           # (L, 1, P) f32
    eps_vec = jnp.asarray(eps_vals, jnp.float32)   # (L,)      f32 -> SMEM scalars

    vmem = pl.BlockSpec(memory_space=pltpu.MemorySpace.VMEM)
    smem = pl.BlockSpec(memory_space=pltpu.MemorySpace.SMEM)

    out = pl.pallas_call(
        fused_topology_kernel,
        out_shape=jax.ShapeDtypeStruct((g_pad, P), jnp.float32),
        in_specs=[
            smem,   # 1+eps per layer (SMEM scalars)
            vmem,   # adj
            vmem,   # x0
            vmem,   # pool one-hot
            vmem,   # 1/count
            vmem,   # W1' stacked
            vmem,   # c1 stacked
            vmem,   # W2' stacked
            vmem,   # c2 stacked
        ],
        out_specs=vmem,
    )(eps_vec, adj, x_p, pool_mat, inv_counts, w1s, c1s, w2s, c2s)

    return out[:num_graphs, :hidden], None               # att is None (gat=False)


# ----------------------------- parameter setup --------------------------------

def init_params(key, input_dim, hidden_dim, num_layers):
    layers = []
    d_in = input_dim
    for _ in range(num_layers):
        key, k1, k2, k3, k4, k5, k6, k7, k8, k9, k10 = jax.random.split(key, 11)
        w1 = 0.1 * jax.random.normal(k1, (d_in, hidden_dim), jnp.float32)
        b1 = 0.05 * jax.random.normal(k2, (hidden_dim,), jnp.float32)
        w2 = 0.1 * jax.random.normal(k3, (hidden_dim, hidden_dim), jnp.float32)
        b2 = 0.05 * jax.random.normal(k4, (hidden_dim,), jnp.float32)
        g1 = 1.0 + 0.1 * jax.random.normal(k5, (hidden_dim,), jnp.float32)
        be1 = 0.05 * jax.random.normal(k6, (hidden_dim,), jnp.float32)
        g2 = 1.0 + 0.1 * jax.random.normal(k7, (hidden_dim,), jnp.float32)
        be2 = 0.05 * jax.random.normal(k8, (hidden_dim,), jnp.float32)
        rm1 = 0.1 * jax.random.normal(k9, (hidden_dim,), jnp.float32)
        rv1 = 1.0 + 0.1 * jax.random.uniform(k10, (hidden_dim,), jnp.float32)
        key, k11, k12 = jax.random.split(key, 3)
        rm2 = 0.1 * jax.random.normal(k11, (hidden_dim,), jnp.float32)
        rv2 = 1.0 + 0.1 * jax.random.uniform(k12, (hidden_dim,), jnp.float32)
        eps = jnp.float32(0.1)               # GINConv train_eps parameter
        layers.append(dict(w1=w1, b1=b1, w2=w2, b2=b2,
                           g1=g1, be1=be1, rm1=rm1, rv1=rv1,
                           g2=g2, be2=be2, rm2=rm2, rv2=rv2, eps=eps))
        d_in = hidden_dim
    return layers


# ----------------------------- pure-JAX reference ------------------------------

def reference_forward(x, edge_index, batch, layers, num_graphs,
                      agg_team="mean", mxu_bf16=True):
    """Reference; mxu_bf16=True mirrors the kernel's bf16-MXU / bf16-resident-
    activation / f32-accumulation math exactly."""
    n, _ = x.shape
    src, dst = edge_index[0], edge_index[1]
    adj = jnp.zeros((n, n), jnp.float32).at[dst, src].add(1.0)
    one_hot = jnp.zeros((num_graphs, n), jnp.float32).at[batch, jnp.arange(n)].set(1.0)
    counts = jnp.maximum(one_hot.sum(axis=1, keepdims=True), 1.0)
    inv_counts = 1.0 / counts if agg_team == "mean" else jnp.ones_like(counts)

    def mm(a, b):
        if mxu_bf16:
            a = a.astype(jnp.bfloat16)
            b = b.astype(jnp.bfloat16)
        return jnp.dot(a, b, preferred_element_type=jnp.float32)

    def rt(v):   # bf16 round-trip (resident activation dtype in the kernel)
        return v.astype(jnp.bfloat16).astype(jnp.float32) if mxu_bf16 else v

    h = rt(x)
    for p in layers:
        s1, t1 = _fold_bn(p["g1"], p["be1"], p["rm1"], p["rv1"])
        s2, t2 = _fold_bn(p["g2"], p["be2"], p["rm2"], p["rv2"])
        agg = mm(adj, h)
        z = (1.0 + p["eps"]) * h + agg
        z = jnp.maximum(mm(z, p["w1"] * s1[None, :]) + (p["b1"] * s1 + t1)[None, :], 0.0)
        z = jnp.maximum(mm(z, p["w2"] * s2[None, :]) + (p["b2"] * s2 + t2)[None, :], 0.0)
        h = rt(z)
    pooled = mm(one_hot, h)
    return pooled * inv_counts, None


if __name__ == "__main__":
    key = jax.random.PRNGKey(0)

    N, INPUT_DIM, HIDDEN_DIM, NUM_LAYERS, NUM_GRAPHS = 16, 16, 32, 2, 2

    key, kx = jax.random.split(key)
    x = jax.random.normal(kx, (N, INPUT_DIM), jnp.float32)

    # deterministic graph: bidirectional ring + skip connections
    idx = jnp.arange(N)
    src = jnp.concatenate([idx, (idx + 1) % N, idx])
    dst = jnp.concatenate([(idx + 1) % N, idx, (idx + 3) % N])
    edge_index = jnp.stack([src, dst]).astype(jnp.int32)       # [2, E]

    batch = jnp.concatenate([jnp.zeros(N // 2, jnp.int32),
                             jnp.ones(N - N // 2, jnp.int32)])  # node -> graph id

    layers = init_params(key, INPUT_DIM, HIDDEN_DIM, NUM_LAYERS)

    out, att = topology_channel_forward(x, edge_index, batch, layers, NUM_GRAPHS)
    out = jax.block_until_ready(out)

    ref_bf16, _ = reference_forward(x, edge_index, batch, layers, NUM_GRAPHS, mxu_bf16=True)
    ref_f32, _ = reference_forward(x, edge_index, batch, layers, NUM_GRAPHS, mxu_bf16=False)

    assert out.shape == (NUM_GRAPHS, HIDDEN_DIM)
    assert att is None
    # exact check against a reference using the same bf16-MXU / bf16-activation math
    assert jnp.allclose(out, ref_bf16, atol=1e-3, rtol=1e-3), "mismatch vs bf16 reference"
    # sanity check against the full-f32 module semantics (bf16 rounding only)
    assert jnp.allclose(out, ref_f32, atol=1e-1, rtol=1e-1), "drift vs f32 reference"

    print("KERNEL_OK")
</pallas_src>

<mosaic_0001>
module attributes {stable_mosaic.version = 11 : i64} {
  func.func @fused_topology_kernel(%arg0: memref<2xf32, #tpu.memory_space<smem>>, %arg1: memref<128x128xbf16, #tpu.memory_space<vmem>>, %arg2: memref<128x128xbf16, #tpu.memory_space<vmem>>, %arg3: memref<8x128xbf16, #tpu.memory_space<vmem>>, %arg4: memref<8x1xf32, #tpu.memory_space<vmem>>, %arg5: memref<2x128x128xbf16, #tpu.memory_space<vmem>>, %arg6: memref<2x1x128xf32, #tpu.memory_space<vmem>>, %arg7: memref<2x128x128xbf16, #tpu.memory_space<vmem>>, %arg8: memref<2x1x128xf32, #tpu.memory_space<vmem>>, %arg9: memref<8x128xf32, #tpu.memory_space<vmem>>) attributes {dimension_semantics = [], scalar_prefetch = 0 : i64, scratch_operands = 0 : i64, tpu.core_type = #tpu.core_type<tc>} {
    %c0 = arith.constant 0 : index
    %c0_0 = arith.constant 0 : index
    %0 = vector.load %arg2[%c0, %c0_0] : memref<128x128xbf16, #tpu.memory_space<vmem>>, vector<128x128xbf16>
    %c0_1 = arith.constant 0 : index
    %c0_2 = arith.constant 0 : index
    %1 = vector.load %arg1[%c0_1, %c0_2] : memref<128x128xbf16, #tpu.memory_space<vmem>>, vector<128x128xbf16>
    %cst = arith.constant dense<0.000000e+00> : vector<128x128xf32>
    %2 = tpu.matmul %1, %0, %cst {dimension_numbers = #tpu.dot_dimension_numbers<[1], [0], [0], [1], [0, 0, 1, 1], [], []>} : vector<128x128xbf16>, vector<128x128xbf16>, vector<128x128xf32> -> vector<128x128xf32>
    %3 = arith.extf %0 : vector<128x128xbf16> to vector<128x128xf32>
    %c0_3 = arith.constant 0 : index
    %4 = memref.load %arg0[%c0_3] : memref<2xf32, #tpu.memory_space<smem>>
    %5 = vector.broadcast %4 : f32 to vector<128x128xf32>
    %6 = arith.mulf %3, %5 : vector<128x128xf32>
    %7 = arith.addf %6, %2 : vector<128x128xf32>
    %8 = arith.truncf %7 : vector<128x128xf32> to vector<128x128xbf16>
    %c0_4 = arith.constant 0 : index
    %c0_5 = arith.constant 0 : index
    %c0_6 = arith.constant 0 : index
    %9 = vector.load %arg5[%c0_4, %c0_5, %c0_6] : memref<2x128x128xbf16, #tpu.memory_space<vmem>>, vector<1x128x128xbf16>
    %10 = vector.shape_cast %9 : vector<1x128x128xbf16> to vector<128x128xbf16>
    %cst_7 = arith.constant dense<0.000000e+00> : vector<128x128xf32>
    %11 = tpu.matmul %8, %10, %cst_7 {dimension_numbers = #tpu.dot_dimension_numbers<[1], [0], [0], [1], [0, 0, 1, 1], [], []>} : vector<128x128xbf16>, vector<128x128xbf16>, vector<128x128xf32> -> vector<128x128xf32>
    %c0_8 = arith.constant 0 : index
    %c0_9 = arith.constant 0 : index
    %c0_10 = arith.constant 0 : index
    %12 = vector.load %arg6[%c0_8, %c0_9, %c0_10] : memref<2x1x128xf32, #tpu.memory_space<vmem>>, vector<1x1x128xf32>
    %13 = vector.shape_cast %12 : vector<1x1x128xf32> to vector<1x128xf32>
    %14 = vector.broadcast %13 : vector<1x128xf32> to vector<128x128xf32>
    %15 = arith.addf %11, %14 : vector<128x128xf32>
    %cst_11 = arith.constant 0.000000e+00 : f32
    %16 = vector.broadcast %cst_11 : f32 to vector<128x128xf32>
    %17 = arith.maximumf %15, %16 : vector<128x128xf32>
    %18 = arith.truncf %17 : vector<128x128xf32> to vector<128x128xbf16>
    %c0_12 = arith.constant 0 : index
    %c0_13 = arith.constant 0 : index
    %c0_14 = arith.constant 0 : index
    %19 = vector.load %arg7[%c0_12, %c0_13, %c0_14] : memref<2x128x128xbf16, #tpu.memory_space<vmem>>, vector<1x128x128xbf16>
    %20 = vector.shape_cast %19 : vector<1x128x128xbf16> to vector<128x128xbf16>
    %cst_15 = arith.constant dense<0.000000e+00> : vector<128x128xf32>
    %21 = tpu.matmul %18, %20, %cst_15 {dimension_numbers = #tpu.dot_dimension_numbers<[1], [0], [0], [1], [0, 0, 1, 1], [], []>} : vector<128x128xbf16>, vector<128x128xbf16>, vector<128x128xf32> -> vector<128x128xf32>
    %c0_16 = arith.constant 0 : index
    %c0_17 = arith.constant 0 : index
    %c0_18 = arith.constant 0 : index
    %22 = vector.load %arg8[%c0_16, %c0_17, %c0_18] : memref<2x1x128xf32, #tpu.memory_space<vmem>>, vector<1x1x128xf32>
    %23 = vector.shape_cast %22 : vector<1x1x128xf32> to vector<1x128xf32>
    %24 = vector.broadcast %23 : vector<1x128xf32> to vector<128x128xf32>
    %25 = arith.addf %21, %24 : vector<128x128xf32>
    %cst_19 = arith.constant 0.000000e+00 : f32
    %26 = vector.broadcast %cst_19 : f32 to vector<128x128xf32>
    %27 = arith.maximumf %25, %26 : vector<128x128xf32>
    %28 = arith.truncf %27 : vector<128x128xf32> to vector<128x128xbf16>
    %c0_20 = arith.constant 0 : index
    %c0_21 = arith.constant 0 : index
    %29 = vector.load %arg1[%c0_20, %c0_21] : memref<128x128xbf16, #tpu.memory_space<vmem>>, vector<128x128xbf16>
    %cst_22 = arith.constant dense<0.000000e+00> : vector<128x128xf32>
    %30 = tpu.matmul %29, %28, %cst_22 {dimension_numbers = #tpu.dot_dimension_numbers<[1], [0], [0], [1], [0, 0, 1, 1], [], []>} : vector<128x128xbf16>, vector<128x128xbf16>, vector<128x128xf32> -> vector<128x128xf32>
    %31 = arith.extf %28 : vector<128x128xbf16> to vector<128x128xf32>
    %c1 = arith.constant 1 : index
    %32 = memref.load %arg0[%c1] : memref<2xf32, #tpu.memory_space<smem>>
    %33 = vector.broadcast %32 : f32 to vector<128x128xf32>
    %34 = arith.mulf %31, %33 : vector<128x128xf32>
    %35 = arith.addf %34, %30 : vector<128x128xf32>
    %36 = arith.truncf %35 : vector<128x128xf32> to vector<128x128xbf16>
    %c1_23 = arith.constant 1 : index
    %c0_24 = arith.constant 0 : index
    %c0_25 = arith.constant 0 : index
    %37 = vector.load %arg5[%c1_23, %c0_24, %c0_25] : memref<2x128x128xbf16, #tpu.memory_space<vmem>>, vector<1x128x128xbf16>
    %38 = vector.shape_cast %37 : vector<1x128x128xbf16> to vector<128x128xbf16>
    %cst_26 = arith.constant dense<0.000000e+00> : vector<128x128xf32>
    %39 = tpu.matmul %36, %38, %cst_26 {dimension_numbers = #tpu.dot_dimension_numbers<[1], [0], [0], [1], [0, 0, 1, 1], [], []>} : vector<128x128xbf16>, vector<128x128xbf16>, vector<128x128xf32> -> vector<128x128xf32>
    %c1_27 = arith.constant 1 : index
    %c0_28 = arith.constant 0 : index
    %c0_29 = arith.constant 0 : index
    %40 = vector.load %arg6[%c1_27, %c0_28, %c0_29] : memref<2x1x128xf32, #tpu.memory_space<vmem>>, vector<1x1x128xf32>
    %41 = vector.shape_cast %40 : vector<1x1x128xf32> to vector<1x128xf32>
    %42 = vector.broadcast %41 : vector<1x128xf32> to vector<128x128xf32>
    %43 = arith.addf %39, %42 : vector<128x128xf32>
    %cst_30 = arith.constant 0.000000e+00 : f32
    %44 = vector.broadcast %cst_30 : f32 to vector<128x128xf32>
    %45 = arith.maximumf %43, %44 : vector<128x128xf32>
    %46 = arith.truncf %45 : vector<128x128xf32> to vector<128x128xbf16>
    %c1_31 = arith.constant 1 : index
    %c0_32 = arith.constant 0 : index
    %c0_33 = arith.constant 0 : index
    %47 = vector.load %arg7[%c1_31, %c0_32, %c0_33] : memref<2x128x128xbf16, #tpu.memory_space<vmem>>, vector<1x128x128xbf16>
    %48 = vector.shape_cast %47 : vector<1x128x128xbf16> to vector<128x128xbf16>
    %cst_34 = arith.constant dense<0.000000e+00> : vector<128x128xf32>
    %49 = tpu.matmul %46, %48, %cst_34 {dimension_numbers = #tpu.dot_dimension_numbers<[1], [0], [0], [1], [0, 0, 1, 1], [], []>} : vector<128x128xbf16>, vector<128x128xbf16>, vector<128x128xf32> -> vector<128x128xf32>
    %c1_35 = arith.constant 1 : index
    %c0_36 = arith.constant 0 : index
    %c0_37 = arith.constant 0 : index
    %50 = vector.load %arg8[%c1_35, %c0_36, %c0_37] : memref<2x1x128xf32, #tpu.memory_space<vmem>>, vector<1x1x128xf32>
    %51 = vector.shape_cast %50 : vector<1x1x128xf32> to vector<1x128xf32>
    %52 = vector.broadcast %51 : vector<1x128xf32> to vector<128x128xf32>
    %53 = arith.addf %49, %52 : vector<128x128xf32>
    %cst_38 = arith.constant 0.000000e+00 : f32
    %54 = vector.broadcast %cst_38 : f32 to vector<128x128xf32>
    %55 = arith.maximumf %53, %54 : vector<128x128xf32>
    %56 = arith.truncf %55 : vector<128x128xf32> to vector<128x128xbf16>
    %c0_39 = arith.constant 0 : index
    %c0_40 = arith.constant 0 : index
    %57 = vector.load %arg3[%c0_39, %c0_40] : memref<8x128xbf16, #tpu.memory_space<vmem>>, vector<8x128xbf16>
    %cst_41 = arith.constant dense<0.000000e+00> : vector<8x128xf32>
    %58 = tpu.matmul %57, %56, %cst_41 {dimension_numbers = #tpu.dot_dimension_numbers<[1], [0], [0], [1], [0, 0, 1, 1], [], []>} : vector<8x128xbf16>, vector<128x128xbf16>, vector<8x128xf32> -> vector<8x128xf32>
    %c0_42 = arith.constant 0 : index
    %c0_43 = arith.constant 0 : index
    %59 = vector.load %arg4[%c0_42, %c0_43] : memref<8x1xf32, #tpu.memory_space<vmem>>, vector<8x1xf32>
    %60 = vector.broadcast %59 : vector<8x1xf32> to vector<8x128xf32>
    %61 = arith.mulf %58, %60 : vector<8x128xf32>
    %c0_44 = arith.constant 0 : index
    %c0_45 = arith.constant 0 : index
    %62 = vector.load %arg9[%c0_44, %c0_45] : memref<8x128xf32, #tpu.memory_space<vmem>>, vector<8x128xf32>
    tpu.vector_store %arg9[%c0_44, %c0_45], %61 {strides = array<i32>} : memref<8x128xf32, #tpu.memory_space<vmem>>, vector<8x128xf32>,
    return
  }
}

</mosaic_0001>

<llo_original>
// kernel: tpu_custom_call.1
$region0: #{tpu_custom_call.1}
  #allocation0 [shape = 'u32[]', space=smem, size = 0x4, offset = 0x4, fixed_abs, tag = 'smem constant byte address 0x4 - core index']
  #allocation1 [shape = 'u32[144,128]{1,0:T(1,128)}', space=vmem, size = 0x12000, scoped, tag = 'internal scratch']
  %s0 = inlined_call_operand.vmem [shape: f32[2], index: 0, kind: input, shape index: {}]
  %s1 = inlined_call_operand.hbm [shape: bf16[128,128], index: 1, kind: input, shape index: {}]
  %s2 = inlined_call_operand.hbm [shape: bf16[128,128], index: 2, kind: input, shape index: {}]
  %s3 = inlined_call_operand.vmem [shape: bf16[8,128], index: 3, kind: input, shape index: {}]
  %s4 = inlined_call_operand.vmem [shape: f32[8,1], index: 4, kind: input, shape index: {}]
  %s5 = inlined_call_operand.hbm [shape: bf16[2,128,128], index: 5, kind: input, shape index: {}]
  %s6 = inlined_call_operand.vmem [shape: f32[2,1,128], index: 6, kind: input, shape index: {}]
  %s7 = inlined_call_operand.hbm [shape: bf16[2,128,128], index: 7, kind: input, shape index: {}]
  %s8 = inlined_call_operand.vmem [shape: f32[2,1,128], index: 8, kind: input, shape index: {}]
  %s9 = inlined_call_operand.hbm [shape: f32[8,128], index: 9, kind: output, shape index: {}]
  %s10 = sld [smem:[#allocation0]]
  $region66: #{tpu_custom_call.1} parent=0
    _
  %s12 = ssub.s32 1, %s10
  %s13 = scalar_select 0, %s12, %s10
  $region1: #{tpu_custom_call.1} parent=0
    #allocation2 [shape = 'u8[512]{0}', space=smem, size = 0x200, scoped, tag = 'input window, operand 0, single buffered']
    #allocation3 [shape = 's32[1]{0}', space=sflag, size = 0x4, scoped, tag = 'scoped memory for tpu_custom_call.1']
    #allocation4 [shape = 's32[1]{0}', space=sflag, size = 0x4, scoped, tag = 'scoped memory for tpu_custom_call.1']
    #allocation5 [shape = 's32[1]{0}', space=sflag, size = 0x4, scoped, tag = 'scoped memory for tpu_custom_call.1']
    #allocation6 [shape = 'u8[32768]{0}', space=vmem, size = 0x8000, scoped, tag = 'input window, operand 1, single buffered']
    #allocation7 [shape = 'u8[32768]{0}', space=vmem, size = 0x8000, scoped, tag = 'input window, operand 2, single buffered']
    #allocation8 [shape = 's32[1]{0}', space=sflag, size = 0x4, scoped, tag = 'scoped memory for tpu_custom_call.1']
    #allocation9 [shape = 'u8[65536]{0}', space=vmem, size = 0x10000, scoped, tag = 'input window, operand 5, single buffered']
    #allocation10 [shape = 'u8[65536]{0}', space=vmem, size = 0x10000, scoped, tag = 'input window, operand 7, single buffered']
    #allocation11 [shape = 's32[1]{0}', space=sflag, size = 0x4, scoped, tag = 'scoped memory for tpu_custom_call.1']
    #allocation12 [shape = 'u8[4096]{0}', space=vmem, size = 0x1000, scoped, tag = 'output window, operand 0, single buffered']
    %14 = vsyncpa [#allocation5], 0
    %15 = vsyncpa [#allocation3], 0
    %16 = vsyncpa [#allocation8], 0
    %17 = vsyncpa [#allocation11], 0
    %18 = vsyncpa [#allocation4], 0
    // Predicated region
    $region2: #{tpu_custom_call.1} parent=1 // pred_check
      _
    $region3: #{tpu_custom_call.1} parent=1 // pred_check_branch
      %20 = sbr.rel (0) target = $region5
    $region4: #{tpu_custom_call.1} parent=1 // pred_region
      %s22 = ssub.s32 16, 16
      %23 = vsyncadd [#allocation5], %s22
      %s25 = sshll.u32 %s0, 4
      %s26 = int_to_ptr.vmem [resolvable:$true] %s25
      %28 = dma.vmem_to_smem %s26, 16, [#allocation2], [#allocation5]
    $region5: #{tpu_custom_call.1} parent=1 // pred_fallthru
      _
    // Predicated region
    $region6: #{tpu_custom_call.1} parent=1 // pred_check
      _
    $region7: #{tpu_custom_call.1} parent=1 // pred_check_branch
      %30 = sbr.rel (0) target = $region9
    $region8: #{tpu_custom_call.1} parent=1 // pred_region
      %s32 = ssub.s32 1024, 1024
      %33 = vsyncadd [#allocation3], %s32
      %s34 = sshll.u32 [#allocation6], 4
      %s35 = int_to_ptr.vmem [resolvable:$true] %s34
      %40 = dma.hbm_to_vmem [thread:$0]  %s1, 1024, %s35, [#allocation3], 64, 64, 4
    $region9: #{tpu_custom_call.1} parent=1 // pred_fallthru
      _
    // Predicated region
    $region10: #{tpu_custom_call.1} parent=1 // pred_check
      _
    $region11: #{tpu_custom_call.1} parent=1 // pred_check_branch
      %42 = sbr.rel (0) target = $region13
    $region12: #{tpu_custom_call.1} parent=1 // pred_region
      %s44 = ssub.s32 1024, 1024
      %45 = vsyncadd [#allocation8], %s44
      %s46 = sshll.u32 [#allocation7], 4
      %s47 = int_to_ptr.vmem [resolvable:$true] %s46
      %52 = dma.hbm_to_vmem [thread:$0]  %s2, 1024, %s47, [#allocation8], 64, 64, 4
    $region13: #{tpu_custom_call.1} parent=1 // pred_fallthru
      _
    // Predicated region
    $region14: #{tpu_custom_call.1} parent=1 // pred_check
      _
    $region15: #{tpu_custom_call.1} parent=1 // pred_check_branch
      %54 = sbr.rel (0) target = $region17
    $region16: #{tpu_custom_call.1} parent=1 // pred_region
      _
    $region17: #{tpu_custom_call.1} parent=1 // pred_fallthru
      _
    // Predicated region
    $region18: #{tpu_custom_call.1} parent=1 // pred_check
      _
    $region19: #{tpu_custom_call.1} parent=1 // pred_check_branch
      %56 = sbr.rel (0) target = $region21
    $region20: #{tpu_custom_call.1} parent=1 // pred_region
      _
    $region21: #{tpu_custom_call.1} parent=1 // pred_fallthru
      _
    // Predicated region
    $region22: #{tpu_custom_call.1} parent=1 // pred_check
      _
    $region23: #{tpu_custom_call.1} parent=1 // pred_check_branch
      %58 = sbr.rel (0) target = $region25
    $region24: #{tpu_custom_call.1} parent=1 // pred_region
      %s60 = ssub.s32 2048, 2048
      %61 = vsyncadd [#allocation8], %s60
      %s62 = sshll.u32 [#allocation9], 4
      %s63 = int_to_ptr.vmem [resolvable:$true] %s62
      %68 = dma.hbm_to_vmem [thread:$0]  %s5, 2048, %s63, [#allocation8], 64, 64, 4
    $region25: #{tpu_custom_call.1} parent=1 // pred_fallthru
      _
    // Predicated region
    $region26: #{tpu_custom_call.1} parent=1 // pred_check
      _
    $region27: #{tpu_custom_call.1} parent=1 // pred_check_branch
      %70 = sbr.rel (0) target = $region29
    $region28: #{tpu_custom_call.1} parent=1 // pred_region
      _
    $region29: #{tpu_custom_call.1} parent=1 // pred_fallthru
      _
    // Predicated region
    $region30: #{tpu_custom_call.1} parent=1 // pred_check
      _
    $region31: #{tpu_custom_call.1} parent=1 // pred_check_branch
      %72 = sbr.rel (0) target = $region33
    $region32: #{tpu_custom_call.1} parent=1 // pred_region
      %s74 = ssub.s32 2048, 2048
      %75 = vsyncadd [#allocation11], %s74
      %s76 = sshll.u32 [#allocation10], 4
      %s77 = int_to_ptr.vmem [resolvable:$true] %s76
      %82 = dma.hbm_to_vmem [thread:$0]  %s7, 2048, %s77, [#allocation11], 64, 64, 4
    $region33: #{tpu_custom_call.1} parent=1 // pred_fallthru
      _
    // Predicated region
    $region34: #{tpu_custom_call.1} parent=1 // pred_check
      _
    $region35: #{tpu_custom_call.1} parent=1 // pred_check_branch
      %84 = sbr.rel (0) target = $region37
    $region36: #{tpu_custom_call.1} parent=1 // pred_region
      _
    $region37: #{tpu_custom_call.1} parent=1 // pred_fallthru
      _
    // Predicated region
    $region38: #{tpu_custom_call.1} parent=1 // pred_check
      _
    $region39: #{tpu_custom_call.1} parent=1 // pred_check_branch
      %86 = sbr.rel (0) target = $region41
    $region40: #{tpu_custom_call.1} parent=1 // pred_region
      %87 = dma.done [#allocation5], 16
    $region41: #{tpu_custom_call.1} parent=1 // pred_fallthru
      _
    // Predicated region
    $region42: #{tpu_custom_call.1} parent=1 // pred_check
      _
    $region43: #{tpu_custom_call.1} parent=1 // pred_check_branch
      %89 = sbr.rel (0) target = $region45
    $region44: #{tpu_custom_call.1} parent=1 // pred_region
      %90 = dma.done [#allocation3], 1024
    $region45: #{tpu_custom_call.1} parent=1 // pred_fallthru
      _
    // Predicated region
    $region46: #{tpu_custom_call.1} parent=1 // pred_check
      _
    $region47: #{tpu_custom_call.1} parent=1 // pred_check_branch
      %92 = sbr.rel (0) target = $region49
    $region48: #{tpu_custom_call.1} parent=1 // pred_region
      %93 = dma.done [#allocation8], 1024
    $region49: #{tpu_custom_call.1} parent=1 // pred_fallthru
      _
    // Predicated region
    $region50: #{tpu_custom_call.1} parent=1 // pred_check
      _
    $region51: #{tpu_custom_call.1} parent=1 // pred_check_branch
      %95 = sbr.rel (0) target = $region53
    $region52: #{tpu_custom_call.1} parent=1 // pred_region
      %96 = dma.done [#allocation8], 2048
    $region53: #{tpu_custom_call.1} parent=1 // pred_fallthru
      _
    // Predicated region
    $region54: #{tpu_custom_call.1} parent=1 // pred_check
      _
    $region55: #{tpu_custom_call.1} parent=1 // pred_check_branch
      %98 = sbr.rel (0) target = $region57
    $region56: #{tpu_custom_call.1} parent=1 // pred_region
      %99 = dma.done [#allocation11], 2048
    $region57: #{tpu_custom_call.1} parent=1 // pred_fallthru
      _
    %100 = sfence
    %v102 = vld [vmem:[#allocation7] sm:$0xf]
    %v103 = vld [vmem:[#allocation7 + $0x4] sm:$0xf]
    %v104 = vld [vmem:[#allocation7 + $0x8] sm:$0xf]
    %v105 = vld [vmem:[#allocation7 + $0xc] sm:$0xf]
    %v106 = vld [vmem:[#allocation7 + $0x10] sm:$0xf]
    %v107 = vld [vmem:[#allocation7 + $0x14] sm:$0xf]
    %v108 = vld [vmem:[#allocation7 + $0x18] sm:$0xf]
    %v109 = vld [vmem:[#allocation7 + $0x1c] sm:$0xf]
    %v110 = vld [vmem:[#allocation7 + $0x20] sm:$0xf]
    %v111 = vld [vmem:[#allocation7 + $0x24] sm:$0xf]
    %v112 = vld [vmem:[#allocation7 + $0x28] sm:$0xf]
    %v113 = vld [vmem:[#allocation7 + $0x2c] sm:$0xf]
    %v114 = vld [vmem:[#allocation7 + $0x30] sm:$0xf]
    %v115 = vld [vmem:[#allocation7 + $0x34] sm:$0xf]
    %v116 = vld [vmem:[#allocation7 + $0x38] sm:$0xf]
    %v117 = vld [vmem:[#allocation7 + $0x3c] sm:$0xf]
    %v118 = vld [vmem:[#allocation6] sm:$0xf]
    %v119 = vld [vmem:[#allocation6 + $0x4] sm:$0xf]
    %v120 = vld [vmem:[#allocation6 + $0x8] sm:$0xf]
    %v121 = vld [vmem:[#allocation6 + $0xc] sm:$0xf]
    %v122 = vld [vmem:[#allocation6 + $0x10] sm:$0xf]
    %v123 = vld [vmem:[#allocation6 + $0x14] sm:$0xf]
    %v124 = vld [vmem:[#allocation6 + $0x18] sm:$0xf]
    %v125 = vld [vmem:[#allocation6 + $0x1c] sm:$0xf]
    %v126 = vld [vmem:[#allocation6 + $0x20] sm:$0xf]
    %v127 = vld [vmem:[#allocation6 + $0x24] sm:$0xf]
    %v128 = vld [vmem:[#allocation6 + $0x28] sm:$0xf]
    %v129 = vld [vmem:[#allocation6 + $0x2c] sm:$0xf]
    %v130 = vld [vmem:[#allocation6 + $0x30] sm:$0xf]
    %v131 = vld [vmem:[#allocation6 + $0x34] sm:$0xf]
    %v132 = vld [vmem:[#allocation6 + $0x38] sm:$0xf]
    %v133 = vld [vmem:[#allocation6 + $0x3c] sm:$0xf]
    %v150 = vunpack.c.l.b16 %v118
    %v151 = vunpack.c.l.b16 %v119
    %v152 = vunpack.c.l.b16 %v120
    %v153 = vunpack.c.l.b16 %v121
    %v154 = vunpack.c.l.b16 %v122
    %v155 = vunpack.c.l.b16 %v123
    %v156 = vunpack.c.l.b16 %v124
    %v157 = vunpack.c.l.b16 %v125
    %v158 = vunpack.c.l.b16 %v126
    %v159 = vunpack.c.l.b16 %v127
    %v160 = vunpack.c.l.b16 %v128
    %v161 = vunpack.c.l.b16 %v129
    %v162 = vunpack.c.l.b16 %v130
    %v163 = vunpack.c.l.b16 %v131
    %v164 = vunpack.c.l.b16 %v132
    %v165 = vunpack.c.l.b16 %v133
    %v166 = vpack.c.b16 %v151, %v150
    %v167 = vpack.c.b16 %v153, %v152
    %v168 = vpack.c.b16 %v155, %v154
    %v169 = vpack.c.b16 %v157, %v156
    %v170 = vpack.c.b16 %v159, %v158
    %v171 = vpack.c.b16 %v161, %v160
    %v172 = vpack.c.b16 %v163, %v162
    %v173 = vpack.c.b16 %v165, %v164
    %v198 = vunpack.c.l.b16 %v102
    %v199 = vunpack.c.l.b16 %v103
    %v200 = vunpack.c.l.b16 %v104
    %v201 = vunpack.c.l.b16 %v105
    %v202 = vunpack.c.l.b16 %v106
    %v203 = vunpack.c.l.b16 %v107
    %v204 = vunpack.c.l.b16 %v108
    %v205 = vunpack.c.l.b16 %v109
    %v206 = vunpack.c.l.b16 %v110
    %v207 = vunpack.c.l.b16 %v111
    %v208 = vunpack.c.l.b16 %v112
    %v209 = vunpack.c.l.b16 %v113
    %v210 = vunpack.c.l.b16 %v114
    %v211 = vunpack.c.l.b16 %v115
    %v212 = vunpack.c.l.b16 %v116
    %v213 = vunpack.c.l.b16 %v117
    %v214 = vpack.c.b16 %v199, %v198
    %v215 = vpack.c.b16 %v201, %v200
    %v216 = vpack.c.b16 %v203, %v202
    %v217 = vpack.c.b16 %v205, %v204
    %v218 = vpack.c.b16 %v207, %v206
    %v219 = vpack.c.b16 %v209, %v208
    %v220 = vpack.c.b16 %v211, %v210
    %v221 = vpack.c.b16 %v213, %v212
    %230 = vmatprep.subr.bf16.mxu0 0
    %231 = vmatpush1.bf16.msra.mxu0 %v221
    %232 = vmatprep.subr.bf16.mxu0 0
    %233 = vmatpush1.bf16.msra.mxu0 %v220
    %234 = vmatprep.subr.bf16.mxu0 0
    %235 = vmatpush1.bf16.msra.mxu0 %v219
    %236 = vmatprep.subr.bf16.mxu0 0
    %237 = vmatpush1.bf16.msra.mxu0 %v218
    %238 = vmatprep.subr.bf16.mxu0 0
    %239 = vmatpush1.bf16.msra.mxu0 %v217
    %240 = vmatprep.subr.bf16.mxu0 0
    %241 = vmatpush1.bf16.msra.mxu0 %v216
    %242 = vmatprep.subr.bf16.mxu0 0
    %243 = vmatpush1.bf16.msra.mxu0 %v215
    %244 = vmatprep.subr.bf16.mxu0 0
    %245 = vmatpush1.bf16.msra.mxu0 %v214
    %246 = vmatprep.subr.bf16.mxu0 0
    %247 = vmatpush2.bf16.msra.mxu0 0
    %248 = vmatprep.subr.bf16.mxu0 0
    %249 = vmatpush2.bf16.msra.mxu0 0
    %250 = vmatprep.subr.bf16.mxu0 0
    %251 = vmatpush2.bf16.msra.mxu0 0
    %252 = vmatprep.subr.bf16.mxu0 0
    %253 = vmatpush2.bf16.msra.mxu0 0
    %254 = vmatprep.subr.bf16.mxu0 0
    %255 = vmatpush2.bf16.msra.mxu0 0
    %256 = vmatprep.subr.bf16.mxu0 0
    %257 = vmatpush2.bf16.msra.mxu0 0
    %258 = vmatprep.subr.bf16.mxu0 0
    %259 = vmatpush2.bf16.msra.mxu0 0
    %260 = vmatprep.subr.bf16.mxu0 0
    %261 = vmatpush2.bf16.msra.mxu0 0
    %262 = vmatprep.mubr.bf16.mxu0 0
    %263 = vmatmul.mubr.bf16.gmra.mxu0 %v166
    %v264 = vpop.f32.mrf.mxu0
    %v265 = vadd.f32 0.0, %v264
    %v266 = vpop.f32.mrf.mxu0
    %v267 = vpop.f32.mrf.mxu0
    %v268 = vadd.f32 0.0, %v267
    %v269 = vpop.f32.mrf.mxu0
    %270 = vmatprep.mubr.bf16.mxu0 0
    %271 = vmatmul.mubr.bf16.gmra.mxu0 %v167
    %v272 = vpop.f32.mrf.mxu0
    %v273 = vadd.f32 0.0, %v272
    %v274 = vpop.f32.mrf.mxu0
    %v275 = vpop.f32.mrf.mxu0
    %v276 = vadd.f32 0.0, %v275
    %v277 = vpop.f32.mrf.mxu0
    %278 = vmatprep.mubr.bf16.mxu0 0
    %279 = vmatmul.mubr.bf16.gmra.mxu0 %v168
    %v280 = vpop.f32.mrf.mxu0
    %v281 = vadd.f32 0.0, %v280
    %v282 = vpop.f32.mrf.mxu0
    %v283 = vpop.f32.mrf.mxu0
    %v284 = vadd.f32 0.0, %v283
    %v285 = vpop.f32.mrf.mxu0
    %286 = vmatprep.mubr.bf16.mxu0 0
    %287 = vmatmul.mubr.bf16.gmra.mxu0 %v169
    %v288 = vpop.f32.mrf.mxu0
    %v289 = vadd.f32 0.0, %v288
    %v290 = vpop.f32.mrf.mxu0
    %v291 = vpop.f32.mrf.mxu0
    %v292 = vadd.f32 0.0, %v291
    %v293 = vpop.f32.mrf.mxu0
    %294 = vmatprep.mubr.bf16.mxu0 0
    %295 = vmatmul.mubr.bf16.gmra.mxu0 %v170
    %v296 = vpop.f32.mrf.mxu0
    %v297 = vadd.f32 0.0, %v296
    %v298 = vpop.f32.mrf.mxu0
    %v299 = vpop.f32.mrf.mxu0
    %v300 = vadd.f32 0.0, %v299
    %v301 = vpop.f32.mrf.mxu0
    %302 = vmatprep.mubr.bf16.mxu0 0
    %303 = vmatmul.mubr.bf16.gmra.mxu0 %v171
    %v304 = vpop.f32.mrf.mxu0
    %v305 = vadd.f32 0.0, %v304
    %v306 = vpop.f32.mrf.mxu0
    %v307 = vpop.f32.mrf.mxu0
    %v308 = vadd.f32 0.0, %v307
    %v309 = vpop.f32.mrf.mxu0
    %310 = vmatprep.mubr.bf16.mxu0 0
    %311 = vmatmul.mubr.bf16.gmra.mxu0 %v172
    %v312 = vpop.f32.mrf.mxu0
    %v313 = vadd.f32 0.0, %v312
    %v314 = vpop.f32.mrf.mxu0
    %v315 = vpop.f32.mrf.mxu0
    %v316 = vadd.f32 0.0, %v315
    %v317 = vpop.f32.mrf.mxu0
    %318 = vmatprep.mubr.bf16.mxu0 0
    %319 = vmatmul.mubr.bf16.gmra.mxu0 %v173
    %v320 = vpop.f32.mrf.mxu0
    %v321 = vadd.f32 0.0, %v320
    %v322 = vpop.f32.mrf.mxu0
    %v323 = vpop.f32.mrf.mxu0
    %v324 = vadd.f32 0.0, %v323
    %v325 = vpop.f32.mrf.mxu0
    %326 = vdwg.mxu0
    %v327 = vunpack.c.l.bf16 %v102
    %v328 = vunpack.c.l.bf16 %v103
    %v329 = vunpack.c.l.bf16 %v104
    %v330 = vunpack.c.l.bf16 %v105
    %v331 = vunpack.c.l.bf16 %v106
    %v332 = vunpack.c.l.bf16 %v107
    %v333 = vunpack.c.l.bf16 %v108
    %v334 = vunpack.c.l.bf16 %v109
    %v335 = vunpack.c.l.bf16 %v110
    %v336 = vunpack.c.l.bf16 %v111
    %v337 = vunpack.c.l.bf16 %v112
    %v338 = vunpack.c.l.bf16 %v113
    %v339 = vunpack.c.l.bf16 %v114
    %v340 = vunpack.c.l.bf16 %v115
    %v341 = vunpack.c.l.bf16 %v116
    %v342 = vunpack.c.l.bf16 %v117
    %s343 = sld [smem:[#allocation2]]
    %v344 = vstv %s343
    %v345 = vmul.f32 %v327, %v344
    %v346 = vmul.f32 %v328, %v344
    %v347 = vmul.f32 %v329, %v344
    %v348 = vmul.f32 %v330, %v344
    %v349 = vmul.f32 %v331, %v344
    %v350 = vmul.f32 %v332, %v344
    %v351 = vmul.f32 %v333, %v344
    %v352 = vmul.f32 %v334, %v344
    %v353 = vmul.f32 %v335, %v344
    %v354 = vmul.f32 %v336, %v344
    %v355 = vmul.f32 %v337, %v344
    %v356 = vmul.f32 %v338, %v344
    %v357 = vmul.f32 %v339, %v344
    %v358 = vmul.f32 %v340, %v344
    %v359 = vmul.f32 %v341, %v344
    %v360 = vmul.f32 %v342, %v344
    %v361 = vadd.f32 %v345, %v265
    %v362 = vadd.f32 %v346, %v268
    %v363 = vadd.f32 %v347, %v273
    %v364 = vadd.f32 %v348, %v276
    %v365 = vadd.f32 %v349, %v281
    %v366 = vadd.f32 %v350, %v284
    %v367 = vadd.f32 %v351, %v289
    %v368 = vadd.f32 %v352, %v292
    %v369 = vadd.f32 %v353, %v297
    %v370 = vadd.f32 %v354, %v300
    %v371 = vadd.f32 %v355, %v305
    %v372 = vadd.f32 %v356, %v308
    %v373 = vadd.f32 %v357, %v313
    %v374 = vadd.f32 %v358, %v316
    %v375 = vadd.f32 %v359, %v321
    %v376 = vadd.f32 %v360, %v324
    %v377 = vpack.c.bf16 %v362, %v361
    %v378 = vpack.c.bf16 %v364, %v363
    %v379 = vpack.c.bf16 %v366, %v365
    %v380 = vpack.c.bf16 %v368, %v367
    %v381 = vpack.c.bf16 %v370, %v369
    %v382 = vpack.c.bf16 %v372, %v371
    %v383 = vpack.c.bf16 %v374, %v373
    %v384 = vpack.c.bf16 %v376, %v375
    %v385 = vld [vmem:[#allocation9] sm:$0xf]
    %v386 = vld [vmem:[#allocation9 + $0x4] sm:$0xf]
    %v387 = vld [vmem:[#allocation9 + $0x8] sm:$0xf]
    %v388 = vld [vmem:[#allocation9 + $0xc] sm:$0xf]
    %v389 = vld [vmem:[#allocation9 + $0x10] sm:$0xf]
    %v390 = vld [vmem:[#allocation9 + $0x14] sm:$0xf]
    %v391 = vld [vmem:[#allocation9 + $0x18] sm:$0xf]
    %v392 = vld [vmem:[#allocation9 + $0x1c] sm:$0xf]
    %v393 = vld [vmem:[#allocation9 + $0x20] sm:$0xf]
    %v394 = vld [vmem:[#allocation9 + $0x24] sm:$0xf]
    %v395 = vld [vmem:[#allocation9 + $0x28] sm:$0xf]
    %v396 = vld [vmem:[#allocation9 + $0x2c] sm:$0xf]
    %v397 = vld [vmem:[#allocation9 + $0x30] sm:$0xf]
    %v398 = vld [vmem:[#allocation9 + $0x34] sm:$0xf]
    %v399 = vld [vmem:[#allocation9 + $0x38] sm:$0xf]
    %v400 = vld [vmem:[#allocation9 + $0x3c] sm:$0xf]
    %v401 = vld [vmem:[%s6] sm:$0x1]
    %v403 = vlaneseq
    %v404 = vshrl.u32 %v403, 7
    %v405 = vsub.s32 0, %v404
    %v406 = vrot.slane %v401, %v405
    %v424 = vunpack.c.l.b16 %v385
    %v425 = vunpack.c.l.b16 %v386
    %v426 = vunpack.c.l.b16 %v387
    %v427 = vunpack.c.l.b16 %v388
    %v428 = vunpack.c.l.b16 %v389
    %v429 = vunpack.c.l.b16 %v390
    %v430 = vunpack.c.l.b16 %v391
    %v431 = vunpack.c.l.b16 %v392
    %v432 = vunpack.c.l.b16 %v393
    %v433 = vunpack.c.l.b16 %v394
    %v434 = vunpack.c.l.b16 %v395
    %v435 = vunpack.c.l.b16 %v396
    %v436 = vunpack.c.l.b16 %v397
    %v437 = vunpack.c.l.b16 %v398
    %v438 = vunpack.c.l.b16 %v399
    %v439 = vunpack.c.l.b16 %v400
    %v440 = vpack.c.b16 %v425, %v424
    %v441 = vpack.c.b16 %v427, %v426
    %v442 = vpack.c.b16 %v429, %v428
    %v443 = vpack.c.b16 %v431, %v430
    %v444 = vpack.c.b16 %v433, %v432
    %v445 = vpack.c.b16 %v435, %v434
    %v446 = vpack.c.b16 %v437, %v436
    %v447 = vpack.c.b16 %v439, %v438
    %456 = vmatprep.subr.bf16.mxu0 0
    %457 = vmatpush1.bf16.msra.mxu0 %v447
    %458 = vmatprep.subr.bf16.mxu0 0
    %459 = vmatpush1.bf16.msra.mxu0 %v446
    %460 = vmatprep.subr.bf16.mxu0 0
    %461 = vmatpush1.bf16.msra.mxu0 %v445
    %462 = vmatprep.subr.bf16.mxu0 0
    %463 = vmatpush1.bf16.msra.mxu0 %v444
    %464 = vmatprep.subr.bf16.mxu0 0
    %465 = vmatpush1.bf16.msra.mxu0 %v443
    %466 = vmatprep.subr.bf16.mxu0 0
    %467 = vmatpush1.bf16.msra.mxu0 %v442
    %468 = vmatprep.subr.bf16.mxu0 0
    %469 = vmatpush1.bf16.msra.mxu0 %v441
    %470 = vmatprep.subr.bf16.mxu0 0
    %471 = vmatpush1.bf16.msra.mxu0 %v440
    %472 = vmatprep.subr.bf16.mxu0 0
    %473 = vmatpush2.bf16.msra.mxu0 0
    %474 = vmatprep.subr.bf16.mxu0 0
    %475 = vmatpush2.bf16.msra.mxu0 0
    %476 = vmatprep.subr.bf16.mxu0 0
    %477 = vmatpush2.bf16.msra.mxu0 0
    %478 = vmatprep.subr.bf16.mxu0 0
    %479 = vmatpush2.bf16.msra.mxu0 0
    %480 = vmatprep.subr.bf16.mxu0 0
    %481 = vmatpush2.bf16.msra.mxu0 0
    %482 = vmatprep.subr.bf16.mxu0 0
    %483 = vmatpush2.bf16.msra.mxu0 0
    %484 = vmatprep.subr.bf16.mxu0 0
    %485 = vmatpush2.bf16.msra.mxu0 0
    %486 = vmatprep.subr.bf16.mxu0 0
    %487 = vmatpush2.bf16.msra.mxu0 0
    %488 = vmatprep.mubr.bf16.mxu0 0
    %489 = vmatmul.mubr.bf16.gmra.mxu0 %v377
    %v490 = vpop.f32.mrf.mxu0
    %v491 = vadd.f32 %v406, %v490
    %v492 = vpop.f32.mrf.mxu0
    %v493 = vpop.f32.mrf.mxu0
    %v494 = vadd.f32 %v406, %v493
    %v495 = vpop.f32.mrf.mxu0
    %496 = vmatprep.mubr.bf16.mxu0 0
    %497 = vmatmul.mubr.bf16.gmra.mxu0 %v378
    %v498 = vpop.f32.mrf.mxu0
    %v499 = vadd.f32 %v406, %v498
    %v500 = vpop.f32.mrf.mxu0
    %v501 = vpop.f32.mrf.mxu0
    %v502 = vadd.f32 %v406, %v501
    %v503 = vpop.f32.mrf.mxu0
    %504 = vmatprep.mubr.bf16.mxu0 0
    %505 = vmatmul.mubr.bf16.gmra.mxu0 %v379
    %v506 = vpop.f32.mrf.mxu0
    %v507 = vadd.f32 %v406, %v506
    %v508 = vpop.f32.mrf.mxu0
    %v509 = vpop.f32.mrf.mxu0
    %v510 = vadd.f32 %v406, %v509
    %v511 = vpop.f32.mrf.mxu0
    %512 = vmatprep.mubr.bf16.mxu0 0
    %513 = vmatmul.mubr.bf16.gmra.mxu0 %v380
    %v514 = vpop.f32.mrf.mxu0
    %v515 = vadd.f32 %v406, %v514
    %v516 = vpop.f32.mrf.mxu0
    %v517 = vpop.f32.mrf.mxu0
    %v518 = vadd.f32 %v406, %v517
    %v519 = vpop.f32.mrf.mxu0
    %520 = vmatprep.mubr.bf16.mxu0 0
    %521 = vmatmul.mubr.bf16.gmra.mxu0 %v381
    %v522 = vpop.f32.mrf.mxu0
    %v523 = vadd.f32 %v406, %v522
    %v524 = vpop.f32.mrf.mxu0
    %v525 = vpop.f32.mrf.mxu0
    %v526 = vadd.f32 %v406, %v525
    %v527 = vpop.f32.mrf.mxu0
    %528 = vmatprep.mubr.bf16.mxu0 0
    %529 = vmatmul.mubr.bf16.gmra.mxu0 %v382
    %v530 = vpop.f32.mrf.mxu0
    %v531 = vadd.f32 %v406, %v530
    %v532 = vpop.f32.mrf.mxu0
    %v533 = vpop.f32.mrf.mxu0
    %v534 = vadd.f32 %v406, %v533
    %v535 = vpop.f32.mrf.mxu0
    %536 = vmatprep.mubr.bf16.mxu0 0
    %537 = vmatmul.mubr.bf16.gmra.mxu0 %v383
    %v538 = vpop.f32.mrf.mxu0
    %v539 = vadd.f32 %v406, %v538
    %v540 = vpop.f32.mrf.mxu0
    %v541 = vpop.f32.mrf.mxu0
    %v542 = vadd.f32 %v406, %v541
    %v543 = vpop.f32.mrf.mxu0
    %544 = vmatprep.mubr.bf16.mxu0 0
    %545 = vmatmul.mubr.bf16.gmra.mxu0 %v384
    %v546 = vpop.f32.mrf.mxu0
    %v547 = vadd.f32 %v406, %v546
    %v548 = vpop.f32.mrf.mxu0
    %v549 = vpop.f32.mrf.mxu0
    %v550 = vadd.f32 %v406, %v549
    %v551 = vpop.f32.mrf.mxu0
    %552 = vdwg.mxu0
    %v553 = vmax.f32 %v491, 0.0
    %v554 = vmax.f32 %v494, 0.0
    %v555 = vmax.f32 %v499, 0.0
    %v556 = vmax.f32 %v502, 0.0
    %v557 = vmax.f32 %v507, 0.0
    %v558 = vmax.f32 %v510, 0.0
    %v559 = vmax.f32 %v515, 0.0
    %v560 = vmax.f32 %v518, 0.0
    %v561 = vmax.f32 %v523, 0.0
    %v562 = vmax.f32 %v526, 0.0
    %v563 = vmax.f32 %v531, 0.0
    %v564 = vmax.f32 %v534, 0.0
    %v565 = vmax.f32 %v539, 0.0
    %v566 = vmax.f32 %v542, 0.0
    %v567 = vmax.f32 %v547, 0.0
    %v568 = vmax.f32 %v550, 0.0
    %v569 = vpack.c.bf16 %v554, %v553
    %v570 = vpack.c.bf16 %v556, %v555
    %v571 = vpack.c.bf16 %v558, %v557
    %v572 = vpack.c.bf16 %v560, %v559
    %v573 = vpack.c.bf16 %v562, %v561
    %v574 = vpack.c.bf16 %v564, %v563
    %v575 = vpack.c.bf16 %v566, %v565
    %v576 = vpack.c.bf16 %v568, %v567
    %v577 = vld [vmem:[#allocation10] sm:$0xf]
    %v578 = vld [vmem:[#allocation10 + $0x4] sm:$0xf]
    %v579 = vld [vmem:[#allocation10 + $0x8] sm:$0xf]
    %v580 = vld [vmem:[#allocation10 + $0xc] sm:$0xf]
    %v581 = vld [vmem:[#allocation10 + $0x10] sm:$0xf]
    %v582 = vld [vmem:[#allocation10 + $0x14] sm:$0xf]
    %v583 = vld [vmem:[#allocation10 + $0x18] sm:$0xf]
    %v584 = vld [vmem:[#allocation10 + $0x1c] sm:$0xf]
    %v585 = vld [vmem:[#allocation10 + $0x20] sm:$0xf]
    %v586 = vld [vmem:[#allocation10 + $0x24] sm:$0xf]
    %v587 = vld [vmem:[#allocation10 + $0x28] sm:$0xf]
    %v588 = vld [vmem:[#allocation10 + $0x2c] sm:$0xf]
    %v589 = vld [vmem:[#allocation10 + $0x30] sm:$0xf]
    %v590 = vld [vmem:[#allocation10 + $0x34] sm:$0xf]
    %v591 = vld [vmem:[#allocation10 + $0x38] sm:$0xf]
    %v592 = vld [vmem:[#allocation10 + $0x3c] sm:$0xf]
    %v593 = vld [vmem:[%s8] sm:$0x1]
    %v595 = vlaneseq
    %v596 = vshrl.u32 %v595, 7
    %v597 = vsub.s32 0, %v596
    %v598 = vrot.slane %v593, %v597
    %v616 = vunpack.c.l.b16 %v577
    %v617 = vunpack.c.l.b16 %v578
    %v618 = vunpack.c.l.b16 %v579
    %v619 = vunpack.c.l.b16 %v580
    %v620 = vunpack.c.l.b16 %v581
    %v621 = vunpack.c.l.b16 %v582
    %v622 = vunpack.c.l.b16 %v583
    %v623 = vunpack.c.l.b16 %v584
    %v624 = vunpack.c.l.b16 %v585
    %v625 = vunpack.c.l.b16 %v586
    %v626 = vunpack.c.l.b16 %v587
    %v627 = vunpack.c.l.b16 %v588
    %v628 = vunpack.c.l.b16 %v589
    %v629 = vunpack.c.l.b16 %v590
    %v630 = vunpack.c.l.b16 %v591
    %v631 = vunpack.c.l.b16 %v592
    %v632 = vpack.c.b16 %v617, %v616
    %v633 = vpack.c.b16 %v619, %v618
    %v634 = vpack.c.b16 %v621, %v620
    %v635 = vpack.c.b16 %v623, %v622
    %v636 = vpack.c.b16 %v625, %v624
    %v637 = vpack.c.b16 %v627, %v626
    %v638 = vpack.c.b16 %v629, %v628
    %v639 = vpack.c.b16 %v631, %v630
    %648 = vmatprep.subr.bf16.mxu0 0
    %649 = vmatpush1.bf16.msra.mxu0 %v639
    %650 = vmatprep.subr.bf16.mxu0 0
    %651 = vmatpush1.bf16.msra.mxu0 %v638
    %652 = vmatprep.subr.bf16.mxu0 0
    %653 = vmatpush1.bf16.msra.mxu0 %v637
    %654 = vmatprep.subr.bf16.mxu0 0
    %655 = vmatpush1.bf16.msra.mxu0 %v636
    %656 = vmatprep.subr.bf16.mxu0 0
    %657 = vmatpush1.bf16.msra.mxu0 %v635
    %658 = vmatprep.subr.bf16.mxu0 0
    %659 = vmatpush1.bf16.msra.mxu0 %v634
    %660 = vmatprep.subr.bf16.mxu0 0
    %661 = vmatpush1.bf16.msra.mxu0 %v633
    %662 = vmatprep.subr.bf16.mxu0 0
    %663 = vmatpush1.bf16.msra.mxu0 %v632
    %664 = vmatprep.subr.bf16.mxu0 0
    %665 = vmatpush2.bf16.msra.mxu0 0
    %666 = vmatprep.subr.bf16.mxu0 0
    %667 = vmatpush2.bf16.msra.mxu0 0
    %668 = vmatprep.subr.bf16.mxu0 0
    %669 = vmatpush2.bf16.msra.mxu0 0
    %670 = vmatprep.subr.bf16.mxu0 0
    %671 = vmatpush2.bf16.msra.mxu0 0
    %672 = vmatprep.subr.bf16.mxu0 0
    %673 = vmatpush2.bf16.msra.mxu0 0
    %674 = vmatprep.subr.bf16.mxu0 0
    %675 = vmatpush2.bf16.msra.mxu0 0
    %676 = vmatprep.subr.bf16.mxu0 0
    %677 = vmatpush2.bf16.msra.mxu0 0
    %678 = vmatprep.subr.bf16.mxu0 0
    %679 = vmatpush2.bf16.msra.mxu0 0
    %680 = vmatprep.mubr.bf16.mxu0 0
    %681 = vmatmul.mubr.bf16.gmra.mxu0 %v569
    %v682 = vpop.f32.mrf.mxu0
    %v683 = vadd.f32 %v598, %v682
    %v684 = vpop.f32.mrf.mxu0
    %v685 = vpop.f32.mrf.mxu0
    %v686 = vadd.f32 %v598, %v685
    %v687 = vpop.f32.mrf.mxu0
    %688 = vmatprep.mubr.bf16.mxu0 0
    %689 = vmatmul.mubr.bf16.gmra.mxu0 %v570
    %v690 = vpop.f32.mrf.mxu0
    %v691 = vadd.f32 %v598, %v690
    %v692 = vpop.f32.mrf.mxu0
    %v693 = vpop.f32.mrf.mxu0
    %v694 = vadd.f32 %v598, %v693
    %v695 = vpop.f32.mrf.mxu0
    %696 = vmatprep.mubr.bf16.mxu0 0
    %697 = vmatmul.mubr.bf16.gmra.mxu0 %v571
    %v698 = vpop.f32.mrf.mxu0
    %v699 = vadd.f32 %v598, %v698
    %v700 = vpop.f32.mrf.mxu0
    %v701 = vpop.f32.mrf.mxu0
    %v702 = vadd.f32 %v598, %v701
    %v703 = vpop.f32.mrf.mxu0
    %704 = vmatprep.mubr.bf16.mxu0 0
    %705 = vmatmul.mubr.bf16.gmra.mxu0 %v572
    %v706 = vpop.f32.mrf.mxu0
    %v707 = vadd.f32 %v598, %v706
    %v708 = vpop.f32.mrf.mxu0
    %v709 = vpop.f32.mrf.mxu0
    %v710 = vadd.f32 %v598, %v709
    %v711 = vpop.f32.mrf.mxu0
    %712 = vmatprep.mubr.bf16.mxu0 0
    %713 = vmatmul.mubr.bf16.gmra.mxu0 %v573
    %v714 = vpop.f32.mrf.mxu0
    %v715 = vadd.f32 %v598, %v714
    %v716 = vpop.f32.mrf.mxu0
    %v717 = vpop.f32.mrf.mxu0
    %v718 = vadd.f32 %v598, %v717
    %v719 = vpop.f32.mrf.mxu0
    %720 = vmatprep.mubr.bf16.mxu0 0
    %721 = vmatmul.mubr.bf16.gmra.mxu0 %v574
    %v722 = vpop.f32.mrf.mxu0
    %v723 = vadd.f32 %v598, %v722
    %v724 = vpop.f32.mrf.mxu0
    %v725 = vpop.f32.mrf.mxu0
    %v726 = vadd.f32 %v598, %v725
    %v727 = vpop.f32.mrf.mxu0
    %728 = vmatprep.mubr.bf16.mxu0 0
    %729 = vmatmul.mubr.bf16.gmra.mxu0 %v575
    %v730 = vpop.f32.mrf.mxu0
    %v731 = vadd.f32 %v598, %v730
    %v732 = vpop.f32.mrf.mxu0
    %v733 = vpop.f32.mrf.mxu0
    %v734 = vadd.f32 %v598, %v733
    %v735 = vpop.f32.mrf.mxu0
    %736 = vmatprep.mubr.bf16.mxu0 0
    %737 = vmatmul.mubr.bf16.gmra.mxu0 %v576
    %v738 = vpop.f32.mrf.mxu0
    %v739 = vadd.f32 %v598, %v738
    %v740 = vpop.f32.mrf.mxu0
    %v741 = vpop.f32.mrf.mxu0
    %v742 = vadd.f32 %v598, %v741
    %v743 = vpop.f32.mrf.mxu0
    %744 = vdwg.mxu0
    %v745 = vmax.f32 %v683, 0.0
    %v746 = vmax.f32 %v686, 0.0
    %v747 = vmax.f32 %v691, 0.0
    %v748 = vmax.f32 %v694, 0.0
    %v749 = vmax.f32 %v699, 0.0
    %v750 = vmax.f32 %v702, 0.0
    %v751 = vmax.f32 %v707, 0.0
    %v752 = vmax.f32 %v710, 0.0
    %v753 = vmax.f32 %v715, 0.0
    %v754 = vmax.f32 %v718, 0.0
    %v755 = vmax.f32 %v723, 0.0
    %v756 = vmax.f32 %v726, 0.0
    %v757 = vmax.f32 %v731, 0.0
    %v758 = vmax.f32 %v734, 0.0
    %v759 = vmax.f32 %v739, 0.0
    %v760 = vmax.f32 %v742, 0.0
    %v761 = vpack.c.bf16 %v746, %v745
    %v762 = vpack.c.bf16 %v748, %v747
    %v763 = vpack.c.bf16 %v750, %v749
    %v764 = vpack.c.bf16 %v752, %v751
    %v765 = vpack.c.bf16 %v754, %v753
    %v766 = vpack.c.bf16 %v756, %v755
    %v767 = vpack.c.bf16 %v758, %v757
    %v768 = vpack.c.bf16 %v760, %v759
    %769 = vmatprep.subr.bf16.mxu0 0
    %770 = vmatpush1.bf16.msra.mxu0 %v768
    %771 = vmatprep.subr.bf16.mxu0 0
    %772 = vmatpush1.bf16.msra.mxu0 %v767
    %773 = vmatprep.subr.bf16.mxu0 0
    %774 = vmatpush1.bf16.msra.mxu0 %v766
    %775 = vmatprep.subr.bf16.mxu0 0
    %776 = vmatpush1.bf16.msra.mxu0 %v765
    %777 = vmatprep.subr.bf16.mxu0 0
    %778 = vmatpush1.bf16.msra.mxu0 %v764
    %779 = vmatprep.subr.bf16.mxu0 0
    %780 = vmatpush1.bf16.msra.mxu0 %v763
    %781 = vmatprep.subr.bf16.mxu0 0
    %782 = vmatpush1.bf16.msra.mxu0 %v762
    %783 = vmatprep.subr.bf16.mxu0 0
    %784 = vmatpush1.bf16.msra.mxu0 %v761
    %785 = vmatprep.subr.bf16.mxu0 0
    %786 = vmatpush2.bf16.msra.mxu0 0
    %787 = vmatprep.subr.bf16.mxu0 0
    %788 = vmatpush2.bf16.msra.mxu0 0
    %789 = vmatprep.subr.bf16.mxu0 0
    %790 = vmatpush2.bf16.msra.mxu0 0
    %791 = vmatprep.subr.bf16.mxu0 0
    %792 = vmatpush2.bf16.msra.mxu0 0
    %793 = vmatprep.subr.bf16.mxu0 0
    %794 = vmatpush2.bf16.msra.mxu0 0
    %795 = vmatprep.subr.bf16.mxu0 0
    %796 = vmatpush2.bf16.msra.mxu0 0
    %797 = vmatprep.subr.bf16.mxu0 0
    %798 = vmatpush2.bf16.msra.mxu0 0
    %799 = vmatprep.subr.bf16.mxu0 0
    %800 = vmatpush2.bf16.msra.mxu0 0
    %801 = vmatprep.mubr.bf16.mxu0 0
    %802 = vmatmul.mubr.bf16.gmra.mxu0 %v166
    %v803 = vpop.f32.mrf.mxu0
    %v804 = vadd.f32 0.0, %v803
    %v805 = vpop.f32.mrf.mxu0
    %v806 = vpop.f32.mrf.mxu0
    %v807 = vadd.f32 0.0, %v806
    %v808 = vpop.f32.mrf.mxu0
    %809 = vmatprep.mubr.bf16.mxu0 0
    %810 = vmatmul.mubr.bf16.gmra.mxu0 %v167
    %v811 = vpop.f32.mrf.mxu0
    %v812 = vadd.f32 0.0, %v811
    %v813 = vpop.f32.mrf.mxu0
    %v814 = vpop.f32.mrf.mxu0
    %v815 = vadd.f32 0.0, %v814
    %v816 = vpop.f32.mrf.mxu0
    %817 = vmatprep.mubr.bf16.mxu0 0
    %818 = vmatmul.mubr.bf16.gmra.mxu0 %v168
    %v819 = vpop.f32.mrf.mxu0
    %v820 = vadd.f32 0.0, %v819
    %v821 = vpop.f32.mrf.mxu0
    %v822 = vpop.f32.mrf.mxu0
    %v823 = vadd.f32 0.0, %v822
    %v824 = vpop.f32.mrf.mxu0
    %825 = vmatprep.mubr.bf16.mxu0 0
    %826 = vmatmul.mubr.bf16.gmra.mxu0 %v169
    %v827 = vpop.f32.mrf.mxu0
    %v828 = vadd.f32 0.0, %v827
    %v829 = vpop.f32.mrf.mxu0
    %v830 = vpop.f32.mrf.mxu0
    %v831 = vadd.f32 0.0, %v830
    %v832 = vpop.f32.mrf.mxu0
    %833 = vmatprep.mubr.bf16.mxu0 0
    %834 = vmatmul.mubr.bf16.gmra.mxu0 %v170
    %v835 = vpop.f32.mrf.mxu0
    %v836 = vadd.f32 0.0, %v835
    %v837 = vpop.f32.mrf.mxu0
    %v838 = vpop.f32.mrf.mxu0
    %v839 = vadd.f32 0.0, %v838
    %v840 = vpop.f32.mrf.mxu0
    %841 = vmatprep.mubr.bf16.mxu0 0
    %842 = vmatmul.mubr.bf16.gmra.mxu0 %v171
    %v843 = vpop.f32.mrf.mxu0
    %v844 = vadd.f32 0.0, %v843
    %v845 = vpop.f32.mrf.mxu0
    %v846 = vpop.f32.mrf.mxu0
    %v847 = vadd.f32 0.0, %v846
    %v848 = vpop.f32.mrf.mxu0
    %849 = vmatprep.mubr.bf16.mxu0 0
    %850 = vmatmul.mubr.bf16.gmra.mxu0 %v172
    %v851 = vpop.f32.mrf.mxu0
    %v852 = vadd.f32 0.0, %v851
    %v853 = vpop.f32.mrf.mxu0
    %v854 = vpop.f32.mrf.mxu0
    %v855 = vadd.f32 0.0, %v854
    %v856 = vpop.f32.mrf.mxu0
    %857 = vmatprep.mubr.bf16.mxu0 0
    %858 = vmatmul.mubr.bf16.gmra.mxu0 %v173
    %v859 = vpop.f32.mrf.mxu0
    %v860 = vadd.f32 0.0, %v859
    %v861 = vpop.f32.mrf.mxu0
    %v862 = vpop.f32.mrf.mxu0
    %v863 = vadd.f32 0.0, %v862
    %v864 = vpop.f32.mrf.mxu0
    %865 = vdwg.mxu0
    %v866 = vunpack.c.l.bf16 %v761
    %v867 = vunpack.c.h.bf16 %v761
    %v868 = vunpack.c.l.bf16 %v762
    %v869 = vunpack.c.h.bf16 %v762
    %v870 = vunpack.c.l.bf16 %v763
    %v871 = vunpack.c.h.bf16 %v763
    %v872 = vunpack.c.l.bf16 %v764
    %v873 = vunpack.c.h.bf16 %v764
    %v874 = vunpack.c.l.bf16 %v765
    %v875 = vunpack.c.h.bf16 %v765
    %v876 = vunpack.c.l.bf16 %v766
    %v877 = vunpack.c.h.bf16 %v766
    %v878 = vunpack.c.l.bf16 %v767
    %v879 = vunpack.c.h.bf16 %v767
    %v880 = vunpack.c.l.bf16 %v768
    %v881 = vunpack.c.h.bf16 %v768
    %s882 = sld [smem:[#allocation2 + $0x1]]
    %v883 = vstv %s882
    %v884 = vmul.f32 %v866, %v883
    %v885 = vmul.f32 %v867, %v883
    %v886 = vmul.f32 %v868, %v883
    %v887 = vmul.f32 %v869, %v883
    %v888 = vmul.f32 %v870, %v883
    %v889 = vmul.f32 %v871, %v883
    %v890 = vmul.f32 %v872, %v883
    %v891 = vmul.f32 %v873, %v883
    %v892 = vmul.f32 %v874, %v883
    %v893 = vmul.f32 %v875, %v883
    %v894 = vmul.f32 %v876, %v883
    %v895 = vmul.f32 %v877, %v883
    %v896 = vmul.f32 %v878, %v883
    %v897 = vmul.f32 %v879, %v883
    %v898 = vmul.f32 %v880, %v883
    %v899 = vmul.f32 %v881, %v883
    %v900 = vadd.f32 %v884, %v804
    %v901 = vadd.f32 %v885, %v807
    %v902 = vadd.f32 %v886, %v812
    %v903 = vadd.f32 %v887, %v815
    %v904 = vadd.f32 %v888, %v820
    %v905 = vadd.f32 %v889, %v823
    %v906 = vadd.f32 %v890, %v828
    %v907 = vadd.f32 %v891, %v831
    %v908 = vadd.f32 %v892, %v836
    %v909 = vadd.f32 %v893, %v839
    %v910 = vadd.f32 %v894, %v844
    %v911 = vadd.f32 %v895, %v847
    %v912 = vadd.f32 %v896, %v852
    %v913 = vadd.f32 %v897, %v855
    %v914 = vadd.f32 %v898, %v860
    %v915 = vadd.f32 %v899, %v863
    %v916 = vpack.c.bf16 %v901, %v900
    %v917 = vpack.c.bf16 %v903, %v902
    %v918 = vpack.c.bf16 %v905, %v904
    %v919 = vpack.c.bf16 %v907, %v906
    %v920 = vpack.c.bf16 %v909, %v908
    %v921 = vpack.c.bf16 %v911, %v910
    %v922 = vpack.c.bf16 %v913, %v912
    %v923 = vpack.c.bf16 %v915, %v914
    %s924 = scalar_lea.vmem [#allocation9], 64
    %v925 = vld [vmem:[%s924] sm:$0xf]
    %v926 = vld [vmem:[%s924 + $0x4] sm:$0xf]
    %v927 = vld [vmem:[%s924 + $0x8] sm:$0xf]
    %v928 = vld [vmem:[%s924 + $0xc] sm:$0xf]
    %v929 = vld [vmem:[%s924 + $0x10] sm:$0xf]
    %v930 = vld [vmem:[%s924 + $0x14] sm:$0xf]
    %v931 = vld [vmem:[%s924 + $0x18] sm:$0xf]
    %v932 = vld [vmem:[%s924 + $0x1c] sm:$0xf]
    %v933 = vld [vmem:[%s924 + $0x20] sm:$0xf]
    %v934 = vld [vmem:[%s924 + $0x24] sm:$0xf]
    %v935 = vld [vmem:[%s924 + $0x28] sm:$0xf]
    %v936 = vld [vmem:[%s924 + $0x2c] sm:$0xf]
    %v937 = vld [vmem:[%s924 + $0x30] sm:$0xf]
    %v938 = vld [vmem:[%s924 + $0x34] sm:$0xf]
    %v939 = vld [vmem:[%s924 + $0x38] sm:$0xf]
    %v940 = vld [vmem:[%s924 + $0x3c] sm:$0xf]
    %s941 = scalar_lea.vmem %s6, 1
    %v942 = vld [vmem:[%s941] sm:$0x1]
    %v944 = vlaneseq
    %v945 = vshrl.u32 %v944, 7
    %v946 = vsub.s32 0, %v945
    %v947 = vrot.slane %v942, %v946
    %v965 = vunpack.c.l.b16 %v925
    %v966 = vunpack.c.l.b16 %v926
    %v967 = vunpack.c.l.b16 %v927
    %v968 = vunpack.c.l.b16 %v928
    %v969 = vunpack.c.l.b16 %v929
    %v970 = vunpack.c.l.b16 %v930
    %v971 = vunpack.c.l.b16 %v931
    %v972 = vunpack.c.l.b16 %v932
    %v973 = vunpack.c.l.b16 %v933
    %v974 = vunpack.c.l.b16 %v934
    %v975 = vunpack.c.l.b16 %v935
    %v976 = vunpack.c.l.b16 %v936
    %v977 = vunpack.c.l.b16 %v937
    %v978 = vunpack.c.l.b16 %v938
    %v979 = vunpack.c.l.b16 %v939
    %v980 = vunpack.c.l.b16 %v940
    %v981 = vpack.c.b16 %v966, %v965
    %v982 = vpack.c.b16 %v968, %v967
    %v983 = vpack.c.b16 %v970, %v969
    %v984 = vpack.c.b16 %v972, %v971
    %v985 = vpack.c.b16 %v974, %v973
    %v986 = vpack.c.b16 %v976, %v975
    %v987 = vpack.c.b16 %v978, %v977
    %v988 = vpack.c.b16 %v980, %v979
    %997 = vmatprep.subr.bf16.mxu0 0
    %998 = vmatpush1.bf16.msra.mxu0 %v988
    %999 = vmatprep.subr.bf16.mxu0 0
    %1000 = vmatpush1.bf16.msra.mxu0 %v987
    %1001 = vmatprep.subr.bf16.mxu0 0
    %1002 = vmatpush1.bf16.msra.mxu0 %v986
    %1003 = vmatprep.subr.bf16.mxu0 0
    %1004 = vmatpush1.bf16.msra.mxu0 %v985
    %1005 = vmatprep.subr.bf16.mxu0 0
    %1006 = vmatpush1.bf16.msra.mxu0 %v984
    %1007 = vmatprep.subr.bf16.mxu0 0
    %1008 = vmatpush1.bf16.msra.mxu0 %v983
    %1009 = vmatprep.subr.bf16.mxu0 0
    %1010 = vmatpush1.bf16.msra.mxu0 %v982
    %1011 = vmatprep.subr.bf16.mxu0 0
    %1012 = vmatpush1.bf16.msra.mxu0 %v981
    %1013 = vmatprep.subr.bf16.mxu0 0
    %1014 = vmatpush2.bf16.msra.mxu0 0
    %1015 = vmatprep.subr.bf16.mxu0 0
    %1016 = vmatpush2.bf16.msra.mxu0 0
    %1017 = vmatprep.subr.bf16.mxu0 0
    %1018 = vmatpush2.bf16.msra.mxu0 0
    %1019 = vmatprep.subr.bf16.mxu0 0
    %1020 = vmatpush2.bf16.msra.mxu0 0
    %1021 = vmatprep.subr.bf16.mxu0 0
    %1022 = vmatpush2.bf16.msra.mxu0 0
    %1023 = vmatprep.subr.bf16.mxu0 0
    %1024 = vmatpush2.bf16.msra.mxu0 0
    %1025 = vmatprep.subr.bf16.mxu0 0
    %1026 = vmatpush2.bf16.msra.mxu0 0
    %1027 = vmatprep.subr.bf16.mxu0 0
    %1028 = vmatpush2.bf16.msra.mxu0 0
    %1029 = vmatprep.mubr.bf16.mxu0 0
    %1030 = vmatmul.mubr.bf16.gmra.mxu0 %v916
    %v1031 = vpop.f32.mrf.mxu0
    %v1032 = vadd.f32 %v947, %v1031
    %v1033 = vpop.f32.mrf.mxu0
    %v1034 = vpop.f32.mrf.mxu0
    %v1035 = vadd.f32 %v947, %v1034
    %v1036 = vpop.f32.mrf.mxu0
    %1037 = vmatprep.mubr.bf16.mxu0 0
    %1038 = vmatmul.mubr.bf16.gmra.mxu0 %v917
    %v1039 = vpop.f32.mrf.mxu0
    %v1040 = vadd.f32 %v947, %v1039
    %v1041 = vpop.f32.mrf.mxu0
    %v1042 = vpop.f32.mrf.mxu0
    %v1043 = vadd.f32 %v947, %v1042
    %v1044 = vpop.f32.mrf.mxu0
    %1045 = vmatprep.mubr.bf16.mxu0 0
    %1046 = vmatmul.mubr.bf16.gmra.mxu0 %v918
    %v1047 = vpop.f32.mrf.mxu0
    %v1048 = vadd.f32 %v947, %v1047
    %v1049 = vpop.f32.mrf.mxu0
    %v1050 = vpop.f32.mrf.mxu0
    %v1051 = vadd.f32 %v947, %v1050
    %v1052 = vpop.f32.mrf.mxu0
    %1053 = vmatprep.mubr.bf16.mxu0 0
    %1054 = vmatmul.mubr.bf16.gmra.mxu0 %v919
    %v1055 = vpop.f32.mrf.mxu0
    %v1056 = vadd.f32 %v947, %v1055
    %v1057 = vpop.f32.mrf.mxu0
    %v1058 = vpop.f32.mrf.mxu0
    %v1059 = vadd.f32 %v947, %v1058
    %v1060 = vpop.f32.mrf.mxu0
    %1061 = vmatprep.mubr.bf16.mxu0 0
    %1062 = vmatmul.mubr.bf16.gmra.mxu0 %v920
    %v1063 = vpop.f32.mrf.mxu0
    %v1064 = vadd.f32 %v947, %v1063
    %v1065 = vpop.f32.mrf.mxu0
    %v1066 = vpop.f32.mrf.mxu0
    %v1067 = vadd.f32 %v947, %v1066
    %v1068 = vpop.f32.mrf.mxu0
    %1069 = vmatprep.mubr.bf16.mxu0 0
    %1070 = vmatmul.mubr.bf16.gmra.mxu0 %v921
    %v1071 = vpop.f32.mrf.mxu0
    %v1072 = vadd.f32 %v947, %v1071
    %v1073 = vpop.f32.mrf.mxu0
    %v1074 = vpop.f32.mrf.mxu0
    %v1075 = vadd.f32 %v947, %v1074
    %v1076 = vpop.f32.mrf.mxu0
    %1077 = vmatprep.mubr.bf16.mxu0 0
    %1078 = vmatmul.mubr.bf16.gmra.mxu0 %v922
    %v1079 = vpop.f32.mrf.mxu0
    %v1080 = vadd.f32 %v947, %v1079
    %v1081 = vpop.f32.mrf.mxu0
    %v1082 = vpop.f32.mrf.mxu0
    %v1083 = vadd.f32 %v947, %v1082
    %v1084 = vpop.f32.mrf.mxu0
    %1085 = vmatprep.mubr.bf16.mxu0 0
    %1086 = vmatmul.mubr.bf16.gmra.mxu0 %v923
    %v1087 = vpop.f32.mrf.mxu0
    %v1088 = vadd.f32 %v947, %v1087
    %v1089 = vpop.f32.mrf.mxu0
    %v1090 = vpop.f32.mrf.mxu0
    %v1091 = vadd.f32 %v947, %v1090
    %v1092 = vpop.f32.mrf.mxu0
    %1093 = vdwg.mxu0
    %v1094 = vmax.f32 %v1032, 0.0
    %v1095 = vmax.f32 %v1035, 0.0
    %v1096 = vmax.f32 %v1040, 0.0
    %v1097 = vmax.f32 %v1043, 0.0
    %v1098 = vmax.f32 %v1048, 0.0
    %v1099 = vmax.f32 %v1051, 0.0
    %v1100 = vmax.f32 %v1056, 0.0
    %v1101 = vmax.f32 %v1059, 0.0
    %v1102 = vmax.f32 %v1064, 0.0
    %v1103 = vmax.f32 %v1067, 0.0
    %v1104 = vmax.f32 %v1072, 0.0
    %v1105 = vmax.f32 %v1075, 0.0
    %v1106 = vmax.f32 %v1080, 0.0
    %v1107 = vmax.f32 %v1083, 0.0
    %v1108 = vmax.f32 %v1088, 0.0
    %v1109 = vmax.f32 %v1091, 0.0
    %v1110 = vpack.c.bf16 %v1095, %v1094
    %v1111 = vpack.c.bf16 %v1097, %v1096
    %v1112 = vpack.c.bf16 %v1099, %v1098
    %v1113 = vpack.c.bf16 %v1101, %v1100
    %v1114 = vpack.c.bf16 %v1103, %v1102
    %v1115 = vpack.c.bf16 %v1105, %v1104
    %v1116 = vpack.c.bf16 %v1107, %v1106
    %v1117 = vpack.c.bf16 %v1109, %v1108
    %s1118 = scalar_lea.vmem [#allocation10], 64
    %v1119 = vld [vmem:[%s1118] sm:$0xf]
    %v1120 = vld [vmem:[%s1118 + $0x4] sm:$0xf]
    %v1121 = vld [vmem:[%s1118 + $0x8] sm:$0xf]
    %v1122 = vld [vmem:[%s1118 + $0xc] sm:$0xf]
    %v1123 = vld [vmem:[%s1118 + $0x10] sm:$0xf]
    %v1124 = vld [vmem:[%s1118 + $0x14] sm:$0xf]
    %v1125 = vld [vmem:[%s1118 + $0x18] sm:$0xf]
    %v1126 = vld [vmem:[%s1118 + $0x1c] sm:$0xf]
    %v1127 = vld [vmem:[%s1118 + $0x20] sm:$0xf]
    %v1128 = vld [vmem:[%s1118 + $0x24] sm:$0xf]
    %v1129 = vld [vmem:[%s1118 + $0x28] sm:$0xf]
    %v1130 = vld [vmem:[%s1118 + $0x2c] sm:$0xf]
    %v1131 = vld [vmem:[%s1118 + $0x30] sm:$0xf]
    %v1132 = vld [vmem:[%s1118 + $0x34] sm:$0xf]
    %v1133 = vld [vmem:[%s1118 + $0x38] sm:$0xf]
    %v1134 = vld [vmem:[%s1118 + $0x3c] sm:$0xf]
    %s1135 = scalar_lea.vmem %s8, 1
    %v1136 = vld [vmem:[%s1135] sm:$0x1]
    %v1138 = vlaneseq
    %v1139 = vshrl.u32 %v1138, 7
    %v1140 = vsub.s32 0, %v1139
    %v1141 = vrot.slane %v1136, %v1140
    %v1159 = vunpack.c.l.b16 %v1119
    %v1160 = vunpack.c.l.b16 %v1120
    %v1161 = vunpack.c.l.b16 %v1121
    %v1162 = vunpack.c.l.b16 %v1122
    %v1163 = vunpack.c.l.b16 %v1123
    %v1164 = vunpack.c.l.b16 %v1124
    %v1165 = vunpack.c.l.b16 %v1125
    %v1166 = vunpack.c.l.b16 %v1126
    %v1167 = vunpack.c.l.b16 %v1127
    %v1168 = vunpack.c.l.b16 %v1128
    %v1169 = vunpack.c.l.b16 %v1129
    %v1170 = vunpack.c.l.b16 %v1130
    %v1171 = vunpack.c.l.b16 %v1131
    %v1172 = vunpack.c.l.b16 %v1132
    %v1173 = vunpack.c.l.b16 %v1133
    %v1174 = vunpack.c.l.b16 %v1134
    %v1175 = vpack.c.b16 %v1160, %v1159
    %v1176 = vpack.c.b16 %v1162, %v1161
    %v1177 = vpack.c.b16 %v1164, %v1163
    %v1178 = vpack.c.b16 %v1166, %v1165
    %v1179 = vpack.c.b16 %v1168, %v1167
    %v1180 = vpack.c.b16 %v1170, %v1169
    %v1181 = vpack.c.b16 %v1172, %v1171
    %v1182 = vpack.c.b16 %v1174, %v1173
    %1191 = vmatprep.subr.bf16.mxu0 0
    %1192 = vmatpush1.bf16.msra.mxu0 %v1182
    %1193 = vmatprep.subr.bf16.mxu0 0
    %1194 = vmatpush1.bf16.msra.mxu0 %v1181
    %1195 = vmatprep.subr.bf16.mxu0 0
    %1196 = vmatpush1.bf16.msra.mxu0 %v1180
    %1197 = vmatprep.subr.bf16.mxu0 0
    %1198 = vmatpush1.bf16.msra.mxu0 %v1179
    %1199 = vmatprep.subr.bf16.mxu0 0
    %1200 = vmatpush1.bf16.msra.mxu0 %v1178
    %1201 = vmatprep.subr.bf16.mxu0 0
    %1202 = vmatpush1.bf16.msra.mxu0 %v1177
    %1203 = vmatprep.subr.bf16.mxu0 0
    %1204 = vmatpush1.bf16.msra.mxu0 %v1176
    %1205 = vmatprep.subr.bf16.mxu0 0
    %1206 = vmatpush1.bf16.msra.mxu0 %v1175
    %1207 = vmatprep.subr.bf16.mxu0 0
    %1208 = vmatpush2.bf16.msra.mxu0 0
    %1209 = vmatprep.subr.bf16.mxu0 0
    %1210 = vmatpush2.bf16.msra.mxu0 0
    %1211 = vmatprep.subr.bf16.mxu0 0
    %1212 = vmatpush2.bf16.msra.mxu0 0
    %1213 = vmatprep.subr.bf16.mxu0 0
    %1214 = vmatpush2.bf16.msra.mxu0 0
    %1215 = vmatprep.subr.bf16.mxu0 0
    %1216 = vmatpush2.bf16.msra.mxu0 0
    %1217 = vmatprep.subr.bf16.mxu0 0
    %1218 = vmatpush2.bf16.msra.mxu0 0
    %1219 = vmatprep.subr.bf16.mxu0 0
    %1220 = vmatpush2.bf16.msra.mxu0 0
    %1221 = vmatprep.subr.bf16.mxu0 0
    %1222 = vmatpush2.bf16.msra.mxu0 0
    %1223 = vmatprep.mubr.bf16.mxu0 0
    %1224 = vmatmul.mubr.bf16.gmra.mxu0 %v1110
    %v1225 = vpop.f32.mrf.mxu0
    %v1226 = vadd.f32 %v1141, %v1225
    %v1227 = vpop.f32.mrf.mxu0
    %v1228 = vpop.f32.mrf.mxu0
    %v1229 = vadd.f32 %v1141, %v1228
    %v1230 = vpop.f32.mrf.mxu0
    %1231 = vmatprep.mubr.bf16.mxu0 0
    %1232 = vmatmul.mubr.bf16.gmra.mxu0 %v1111
    %v1233 = vpop.f32.mrf.mxu0
    %v1234 = vadd.f32 %v1141, %v1233
    %v1235 = vpop.f32.mrf.mxu0
    %v1236 = vpop.f32.mrf.mxu0
    %v1237 = vadd.f32 %v1141, %v1236
    %v1238 = vpop.f32.mrf.mxu0
    %1239 = vmatprep.mubr.bf16.mxu0 0
    %1240 = vmatmul.mubr.bf16.gmra.mxu0 %v1112
    %v1241 = vpop.f32.mrf.mxu0
    %v1242 = vadd.f32 %v1141, %v1241
    %v1243 = vpop.f32.mrf.mxu0
    %v1244 = vpop.f32.mrf.mxu0
    %v1245 = vadd.f32 %v1141, %v1244
    %v1246 = vpop.f32.mrf.mxu0
    %1247 = vmatprep.mubr.bf16.mxu0 0
    %1248 = vmatmul.mubr.bf16.gmra.mxu0 %v1113
    %v1249 = vpop.f32.mrf.mxu0
    %v1250 = vadd.f32 %v1141, %v1249
    %v1251 = vpop.f32.mrf.mxu0
    %v1252 = vpop.f32.mrf.mxu0
    %v1253 = vadd.f32 %v1141, %v1252
    %v1254 = vpop.f32.mrf.mxu0
    %1255 = vmatprep.mubr.bf16.mxu0 0
    %1256 = vmatmul.mubr.bf16.gmra.mxu0 %v1114
    %v1257 = vpop.f32.mrf.mxu0
    %v1258 = vadd.f32 %v1141, %v1257
    %v1259 = vpop.f32.mrf.mxu0
    %v1260 = vpop.f32.mrf.mxu0
    %v1261 = vadd.f32 %v1141, %v1260
    %v1262 = vpop.f32.mrf.mxu0
    %1263 = vmatprep.mubr.bf16.mxu0 0
    %1264 = vmatmul.mubr.bf16.gmra.mxu0 %v1115
    %v1265 = vpop.f32.mrf.mxu0
    %v1266 = vadd.f32 %v1141, %v1265
    %v1267 = vpop.f32.mrf.mxu0
    %v1268 = vpop.f32.mrf.mxu0
    %v1269 = vadd.f32 %v1141, %v1268
    %v1270 = vpop.f32.mrf.mxu0
    %1271 = vmatprep.mubr.bf16.mxu0 0
    %1272 = vmatmul.mubr.bf16.gmra.mxu0 %v1116
    %v1273 = vpop.f32.mrf.mxu0
    %v1274 = vadd.f32 %v1141, %v1273
    %v1275 = vpop.f32.mrf.mxu0
    %v1276 = vpop.f32.mrf.mxu0
    %v1277 = vadd.f32 %v1141, %v1276
    %v1278 = vpop.f32.mrf.mxu0
    %1279 = vmatprep.mubr.bf16.mxu0 0
    %1280 = vmatmul.mubr.bf16.gmra.mxu0 %v1117
    %v1281 = vpop.f32.mrf.mxu0
    %v1282 = vadd.f32 %v1141, %v1281
    %v1283 = vpop.f32.mrf.mxu0
    %v1284 = vpop.f32.mrf.mxu0
    %v1285 = vadd.f32 %v1141, %v1284
    %v1286 = vpop.f32.mrf.mxu0
    %1287 = vdwg.mxu0
    %v1288 = vmax.f32 %v1226, 0.0
    %v1289 = vmax.f32 %v1229, 0.0
    %v1290 = vmax.f32 %v1234, 0.0
    %v1291 = vmax.f32 %v1237, 0.0
    %v1292 = vmax.f32 %v1242, 0.0
    %v1293 = vmax.f32 %v1245, 0.0
    %v1294 = vmax.f32 %v1250, 0.0
    %v1295 = vmax.f32 %v1253, 0.0
    %v1296 = vmax.f32 %v1258, 0.0
    %v1297 = vmax.f32 %v1261, 0.0
    %v1298 = vmax.f32 %v1266, 0.0
    %v1299 = vmax.f32 %v1269, 0.0
    %v1300 = vmax.f32 %v1274, 0.0
    %v1301 = vmax.f32 %v1277, 0.0
    %v1302 = vmax.f32 %v1282, 0.0
    %v1303 = vmax.f32 %v1285, 0.0
    %v1304 = vpack.c.bf16 %v1289, %v1288
    %v1305 = vpack.c.bf16 %v1291, %v1290
    %v1306 = vpack.c.bf16 %v1293, %v1292
    %v1307 = vpack.c.bf16 %v1295, %v1294
    %v1308 = vpack.c.bf16 %v1297, %v1296
    %v1309 = vpack.c.bf16 %v1299, %v1298
    %v1310 = vpack.c.bf16 %v1301, %v1300
    %v1311 = vpack.c.bf16 %v1303, %v1302
    %v1312 = vld [vmem:[%s3] sm:$0xf]
    %1313 = vmatprep.subr.bf16.mxu0 0
    %1314 = vmatpush1.bf16.msra.mxu0 %v1311
    %1315 = vmatprep.subr.bf16.mxu0 0
    %1316 = vmatpush1.bf16.msra.mxu0 %v1310
    %1317 = vmatprep.subr.bf16.mxu0 0
    %1318 = vmatpush1.bf16.msra.mxu0 %v1309
    %1319 = vmatprep.subr.bf16.mxu0 0
    %1320 = vmatpush1.bf16.msra.mxu0 %v1308
    %1321 = vmatprep.subr.bf16.mxu0 0
    %1322 = vmatpush1.bf16.msra.mxu0 %v1307
    %1323 = vmatprep.subr.bf16.mxu0 0
    %1324 = vmatpush1.bf16.msra.mxu0 %v1306
    %1325 = vmatprep.subr.bf16.mxu0 0
    %1326 = vmatpush1.bf16.msra.mxu0 %v1305
    %1327 = vmatprep.subr.bf16.mxu0 0
    %1328 = vmatpush1.bf16.msra.mxu0 %v1304
    %1329 = vmatprep.subr.bf16.mxu0 0
    %1330 = vmatpush2.bf16.msra.mxu0 0
    %1331 = vmatprep.subr.bf16.mxu0 0
    %1332 = vmatpush2.bf16.msra.mxu0 0
    %1333 = vmatprep.subr.bf16.mxu0 0
    %1334 = vmatpush2.bf16.msra.mxu0 0
    %1335 = vmatprep.subr.bf16.mxu0 0
    %1336 = vmatpush2.bf16.msra.mxu0 0
    %1337 = vmatprep.subr.bf16.mxu0 0
    %1338 = vmatpush2.bf16.msra.mxu0 0
    %1339 = vmatprep.subr.bf16.mxu0 0
    %1340 = vmatpush2.bf16.msra.mxu0 0
    %1341 = vmatprep.subr.bf16.mxu0 0
    %1342 = vmatpush2.bf16.msra.mxu0 0
    %1343 = vmatprep.subr.bf16.mxu0 0
    %1344 = vmatpush2.bf16.msra.mxu0 0
    %1345 = vmatprep.mubr.bf16.mxu0 0
    %1346 = vmatmul.mubr.bf16.gmra.mxu0 %v1312
    %v1347 = vpop.f32.mrf.mxu0
    %v1348 = vadd.f32 0.0, %v1347
    %v1349 = vpop.f32.mrf.mxu0
    %v1350 = vpop.f32.mrf.mxu0
    %v1351 = vpop.f32.mrf.mxu0
    %1352 = vdwg.mxu0
    %v1353 = vld [vmem:[%s4] sm:$0xff]
    %1355 = vset.pattern.permute.xlu0 0
    %1356 = vperm.xlu0 %1355, %v1353
    %v1357 = vpop.permute.xlu0 %1356
    %v1359 = vmul.f32 %v1348, %v1357
    %1360 = vst [vmem:[#allocation12] sm:$0xff] %v1359
    // Predicated region
    $region58: #{tpu_custom_call.1} parent=1 // pred_check
      _
    $region59: #{tpu_custom_call.1} parent=1 // pred_check_branch
      %1362 = sbr.rel (0) target = $region61
    $region60: #{tpu_custom_call.1} parent=1 // pred_region
      %s1364 = ssub.s32 128, 128
      %1365 = vsyncadd [#allocation4], %s1364
      %s1367 = sshll.u32 [#allocation12], 4
      %s1368 = int_to_ptr.vmem [resolvable:$true] %s1367
      %1370 = dma.vmem_to_hbm [thread:$0]  %s1368, 128, %s9, [#allocation4]
    $region61: #{tpu_custom_call.1} parent=1 // pred_fallthru
      _
    // Predicated region
    $region62: #{tpu_custom_call.1} parent=1 // pred_check
      _
    $region63: #{tpu_custom_call.1} parent=1 // pred_check_branch
      %1372 = sbr.rel (0) target = $region65
    $region64: #{tpu_custom_call.1} parent=1 // pred_region
      %1373 = dma.done [#allocation4], 128
    $region65: #{tpu_custom_call.1} parent=1 // pred_fallthru
      _
    %1374 = vsyncpa [#allocation3], 1
    %1375 = vsyncpa [#allocation8], 1
    %1376 = vsyncpa [#allocation11], 1
    %1377 = vsyncpa [#allocation4], 1
    %1378 = vsyncpa [#allocation5], 1

</llo_original>
